<compile_context>
chip_gen: v7x
topology: tpu7x:2x2x1
jax: 0.10.0
libtpu: 0.0.40
codegen_flags: <defaults>
</compile_context>

<pallas_src>
import functools

import jax
import jax.numpy as jnp
from jax import lax
from jax.experimental import pallas as pl
from jax.experimental.pallas import tpu as pltpu


# ----------------------------------------------------------------------------
# Fused kernel (grid = (batch_blocks, time_tiles), batch "parallel", time
# "arbitrary").
#   x_ref     : (tT, tB, Din) f32   time/batch tile of the (T, Bp, Din) input
#   w_ih1_ref : (Din, 4H) bf16      transposed PyTorch lstm1.weight_ih
#   w_hh1_ref : (H, 4H)  bf16       transposed PyTorch lstm1.weight_hh
#   b1_ref    : (1, 4H)  f32        lstm1 bias_ih + bias_hh
#   w2_ref    : (2H, 4H) bf16       [w_ih2; w_hh2] stacked (layer-2 concat matmul)
#   b2_ref    : (1, 4H)  f32        lstm2 bias_ih + bias_hh
#   fc*_refs  : fc1 (H, H//2)+(1, H//2); fc2 (H//2, Op)+(1, Op)  (Op lane-padded)
#   out_ref   : (tB, Op) f32        written only on the last time tile
#   gp_sc     : (tT*tB, 4H) VMEM    layer-1 batched input projection (+ bias)
#   h1/c1/h2/c2_sc : (tB, H) VMEM   recurrent state, persists across time tiles
# ----------------------------------------------------------------------------
def _fused_lstm_kernel(x_ref, w_ih1_ref, w_hh1_ref, b1_ref, w2_ref, b2_ref,
                       fc1_w_ref, fc1_b_ref, fc2_w_ref, fc2_b_ref,
                       out_ref, gp_sc, h1_sc, c1_sc, h2_sc, c2_sc,
                       *, hidden, unroll):
    tT, tB, Din = x_ref.shape
    H = hidden
    G = 4 * H
    cdt = jnp.bfloat16                      # MXU operand dtype (f32 accumulate)
    t_idx = pl.program_id(1)

    # ---- hoisted loop invariants (not replicated by the unrolled loop) ----
    w_hh1 = w_hh1_ref[...]                                   # (H, 4H) bf16
    w2 = w2_ref[...]                                         # (2H, 4H) bf16
    b2 = jnp.broadcast_to(b2_ref[...], (tB, G))              # (tB, 4H) f32
    # Gate order [i, f, g, o]: tanh on the "g" lane block, sigmoid elsewhere.
    lane = lax.broadcasted_iota(jnp.int32, (tB, G), 1)
    is_g = (lane >= 2 * H) & (lane < 3 * H)

    def activate(gates):
        # Single EUP tanh for all four gate blocks:
        #   sigmoid(x) = 0.5 * tanh(0.5 * x) + 0.5
        pre = jnp.where(is_g, gates, 0.5 * gates)
        th = jnp.tanh(pre)
        return jnp.where(is_g, th, 0.5 * th + 0.5)

    def cell_update(gates, c):
        a = activate(gates)
        i = a[:, 0 * H:1 * H]
        f = a[:, 1 * H:2 * H]
        g = a[:, 2 * H:3 * H]
        o = a[:, 3 * H:4 * H]
        c_new = f * c + i * g
        h_new = o * jnp.tanh(c_new)
        return h_new, c_new

    # Batched layer-1 input projection for this time tile (bias folded in):
    # one (tT*tB, Din) @ (Din, 4H) MXU matmul, off the serial critical path.
    xb = x_ref[...].reshape(tT * tB, Din).astype(cdt)
    gp_sc[...] = (jnp.dot(xb, w_ih1_ref[...], preferred_element_type=jnp.float32)
                  + b1_ref[...])

    # Re-initialize the recurrent state at the start of each batch block.
    @pl.when(t_idx == 0)
    def _():
        z = jnp.zeros((tB, H), jnp.float32)
        h1_sc[...] = z
        c1_sc[...] = z
        h2_sc[...] = z
        c2_sc[...] = z

    def step(t, carry):
        h1, c1, h2, c2 = carry
        row = pl.multiple_of(t * tB, tB)
        # Layer 1: gates = x_t@W_ih1 + b1 (precomputed) + h1@W_hh1.
        g1 = (gp_sc[pl.ds(row, tB), :]
              + jnp.dot(h1.astype(cdt), w_hh1,
                        preferred_element_type=jnp.float32))
        h1, c1 = cell_update(g1, c1)
        # Layer 2 (interleaved, same step): [h1_t, h2_{t-1}] @ [W_ih2; W_hh2].
        h12 = jnp.concatenate([h1, h2], axis=1).astype(cdt)
        g2 = jnp.dot(h12, w2, preferred_element_type=jnp.float32) + b2
        h2, c2 = cell_update(g2, c2)
        return h1, c1, h2, c2

    h1, c1, h2, c2 = lax.fori_loop(
        0, tT, step,
        (h1_sc[...], c1_sc[...], h2_sc[...], c2_sc[...]),
        unroll=unroll)

    # Persist state for the next time tile of this batch block.
    h1_sc[...] = h1
    c1_sc[...] = c1
    h2_sc[...] = h2
    c2_sc[...] = c2

    # FC head on the final layer-2 hidden, only on the last time tile.
    @pl.when(t_idx == pl.num_programs(1) - 1)
    def _():
        y1 = (jnp.dot(h2.astype(cdt), fc1_w_ref[...],
                      preferred_element_type=jnp.float32) + fc1_b_ref[...])
        y2 = (jnp.dot(y1.astype(cdt), fc2_w_ref[...],
                      preferred_element_type=jnp.float32) + fc2_b_ref[...])
        out_ref[...] = y2.astype(out_ref.dtype)


def _round_up(n, m):
    return ((n + m - 1) // m) * m


def _pick_time_tile(T, target=16):
    for tt in range(min(T, target), 0, -1):
        if T % tt == 0:
            return tt
    return 1


def _whole(arr):
    nd = arr.ndim
    return pl.BlockSpec(arr.shape, lambda *_, _nd=nd: (0,) * _nd)


# ----------------------------------------------------------------------------
# Forward pass matching LSTMModel.forward (batch_first input (B, T, Din))
# ----------------------------------------------------------------------------
def lstm_model_forward(params, x_btd, hidden_size, *, time_tile=None,
                       batch_tile=None):
    B, T, Din = x_btd.shape
    H = hidden_size
    out_size = params["fc2_w"].shape[1]
    Bp = _round_up(B, 8)             # sublane-aligned batch (padded rows inert)
    Op = _round_up(out_size, 128)    # lane-aligned output -> unmasked stores

    tB = batch_tile if batch_tile is not None else min(Bp, 64)
    tB = min(_round_up(tB, 8), Bp)
    assert Bp % tB == 0
    tT = time_tile if time_tile is not None else _pick_time_tile(T)
    assert T % tT == 0, (T, tT)
    nB, nT = Bp // tB, T // tT

    wdt = jnp.bfloat16
    x_tbd = jnp.transpose(x_btd, (1, 0, 2))                  # -> (T, B, Din)
    x_pad = jnp.pad(x_tbd, ((0, 0), (0, Bp - B), (0, 0)))
    w_ih1 = params["w_ih1"].astype(wdt)
    w_hh1 = params["w_hh1"].astype(wdt)
    w2cat = jnp.concatenate([params["w_ih2"], params["w_hh2"]], 0).astype(wdt)
    fc1_w = params["fc1_w"].astype(wdt)
    fc2_w = jnp.pad(params["fc2_w"], ((0, 0), (0, Op - out_size))).astype(wdt)
    fc2_b = jnp.pad(params["fc2_b"], ((0, 0), (0, Op - out_size)))
    b1, b2, fc1_b = params["b1"], params["b2"], params["fc1_b"]

    # Explicit VMEM budget (v7x has 64 MiB physical; 32 MiB scoped default).
    weight_bytes = 2 * (w_ih1.size + w_hh1.size + w2cat.size + fc1_w.size
                        + fc2_w.size)
    bias_bytes = 4 * (b1.size + b2.size + fc1_b.size + fc2_b.size)
    needed = (2 * tT * tB * Din * 4          # double-buffered x tiles
              + tT * tB * 4 * H * 4          # gate-projection scratch
              + 4 * tB * H * 4               # recurrent state
              + 2 * tB * Op * 4              # output block
              + weight_bytes + bias_bytes)
    vmem_limit = int(min(100 * 2**20, max(8 * 2**20, 2 * needed)))

    flops = (2 * T * Bp * 4 * H * (Din + H + 2 * H)
             + 2 * Bp * (H * (H // 2) + (H // 2) * Op))
    transc = 2 * T * Bp * (4 * H + H)
    bytes_accessed = (x_pad.size * 4 + weight_bytes + bias_bytes + Bp * Op * 4)

    kernel = functools.partial(_fused_lstm_kernel, hidden=H,
                               unroll=True if tT <= 8 else 4)

    out_pad = pl.pallas_call(
        kernel,
        out_shape=jax.ShapeDtypeStruct((Bp, Op), jnp.float32),
        grid=(nB, nT),
        in_specs=[
            pl.BlockSpec((tT, tB, Din), lambda b, t: (t, b, 0)),   # x tile
            _whole(w_ih1), _whole(w_hh1), _whole(b1),
            _whole(w2cat), _whole(b2),
            _whole(fc1_w), _whole(fc1_b), _whole(fc2_w), _whole(fc2_b),
        ],
        out_specs=pl.BlockSpec((tB, Op), lambda b, t: (b, 0)),
        scratch_shapes=[
            pltpu.VMEM((tT * tB, 4 * H), jnp.float32),   # gate projections
            pltpu.VMEM((tB, H), jnp.float32),            # h1
            pltpu.VMEM((tB, H), jnp.float32),            # c1
            pltpu.VMEM((tB, H), jnp.float32),            # h2
            pltpu.VMEM((tB, H), jnp.float32),            # c2
        ],
        compiler_params=pltpu.CompilerParams(
            dimension_semantics=("parallel", "arbitrary"),
            vmem_limit_bytes=vmem_limit),
        cost_estimate=pl.CostEstimate(flops=int(flops),
                                      transcendentals=int(transc),
                                      bytes_accessed=int(bytes_accessed)),
    )(x_pad, w_ih1, w_hh1, b1, w2cat, b2, fc1_w, fc1_b, fc2_w, fc2_b)
    return out_pad[:B, :out_size]


# ----------------------------------------------------------------------------
# Parameter init (deterministic, PyTorch-style uniform(-1/sqrt(H), 1/sqrt(H)))
# ----------------------------------------------------------------------------
def init_params(key, input_size, hidden_size, output_size):
    H = hidden_size
    Hf = hidden_size // 2
    k = 1.0 / jnp.sqrt(jnp.float32(H))
    k2 = 1.0 / jnp.sqrt(jnp.float32(Hf))
    keys = jax.random.split(key, 12)

    def u(kk, shape, scale):
        return jax.random.uniform(kk, shape, jnp.float32, -scale, scale)

    return {
        # lstm1: weights stored transposed (in, 4H)
        "w_ih1": u(keys[0], (input_size, 4 * H), k),
        "w_hh1": u(keys[1], (H, 4 * H), k),
        "b1": u(keys[2], (1, 4 * H), k) + u(keys[3], (1, 4 * H), k),
        # lstm2
        "w_ih2": u(keys[4], (H, 4 * H), k),
        "w_hh2": u(keys[5], (H, 4 * H), k),
        "b2": u(keys[6], (1, 4 * H), k) + u(keys[7], (1, 4 * H), k),
        # fc1: (H, H//2), fc2: (H//2, output)
        "fc1_w": u(keys[8], (H, Hf), k),
        "fc1_b": u(keys[9], (1, Hf), k),
        "fc2_w": u(keys[10], (Hf, output_size), k2),
        "fc2_b": u(keys[11], (1, output_size), k2),
    }


# ----------------------------------------------------------------------------
# Pure-JAX reference (mirrors the kernel's bf16-operand / f32-accumulate
# matmuls and tanh-based sigmoid so the tolerance can stay tight).
# ----------------------------------------------------------------------------
def _ref_lstm(x_tbd, w_ih, w_hh, b, H, cdt=jnp.bfloat16):
    B = x_tbd.shape[1]
    wi, wh = w_ih.astype(cdt), w_hh.astype(cdt)
    h0 = jnp.zeros((B, H), jnp.float32)
    c0 = jnp.zeros((B, H), jnp.float32)

    def sig(x):
        return 0.5 * jnp.tanh(0.5 * x) + 0.5

    def step(carry, x_t):
        h, c = carry
        g = (jnp.dot(x_t.astype(cdt), wi, preferred_element_type=jnp.float32)
             + jnp.dot(h.astype(cdt), wh, preferred_element_type=jnp.float32)
             + b)
        i = sig(g[:, 0 * H:1 * H])
        f = sig(g[:, 1 * H:2 * H])
        gg = jnp.tanh(g[:, 2 * H:3 * H])
        o = sig(g[:, 3 * H:4 * H])
        c = f * c + i * gg
        h = o * jnp.tanh(c)
        return (h, c), h

    _, hs = lax.scan(step, (h0, c0), x_tbd)
    return hs


def ref_forward(params, x_btd, H, cdt=jnp.bfloat16):
    x_tbd = jnp.transpose(x_btd, (1, 0, 2))
    h1 = _ref_lstm(x_tbd, params["w_ih1"], params["w_hh1"], params["b1"], H)
    h2 = _ref_lstm(h1, params["w_ih2"], params["w_hh2"], params["b2"], H)
    last = h2[-1]
    y1 = (jnp.dot(last.astype(cdt), params["fc1_w"].astype(cdt),
                  preferred_element_type=jnp.float32) + params["fc1_b"])
    y2 = (jnp.dot(y1.astype(cdt), params["fc2_w"].astype(cdt),
                  preferred_element_type=jnp.float32) + params["fc2_b"])
    return y2


if __name__ == "__main__":
    B, T = 2, 8
    input_size, hidden_size, output_size = 16, 32, 4

    key = jax.random.PRNGKey(0)
    kp, kx = jax.random.split(key)
    params = init_params(kp, input_size, hidden_size, output_size)
    x = jax.random.normal(kx, (B, T, input_size), jnp.float32)

    # time_tile=4 -> 2 time tiles: exercises the grid axis + state carry.
    out = jax.block_until_ready(
        lstm_model_forward(params, x, hidden_size, time_tile=4))
    ref = jax.block_until_ready(ref_forward(params, x, hidden_size))

    assert out.shape == (B, output_size), out.shape
    assert jnp.allclose(out, ref, atol=2e-3, rtol=2e-3), (out, ref)
    print("KERNEL_OK")
</pallas_src>

<mosaic_0001>
module attributes {stable_mosaic.version = 11 : i64} {
  func.func @_fused_lstm_kernel(%arg0: i32, %arg1: i32, %arg2: memref<4x8x16xf32, #tpu.memory_space<vmem>>, %arg3: memref<16x128xbf16, #tpu.memory_space<vmem>>, %arg4: memref<32x128xbf16, #tpu.memory_space<vmem>>, %arg5: memref<1x128xf32, #tpu.memory_space<vmem>>, %arg6: memref<64x128xbf16, #tpu.memory_space<vmem>>, %arg7: memref<1x128xf32, #tpu.memory_space<vmem>>, %arg8: memref<32x16xbf16, #tpu.memory_space<vmem>>, %arg9: memref<1x16xf32, #tpu.memory_space<vmem>>, %arg10: memref<16x128xbf16, #tpu.memory_space<vmem>>, %arg11: memref<1x128xf32, #tpu.memory_space<vmem>>, %arg12: memref<8x128xf32, #tpu.memory_space<vmem>>, %arg13: memref<32x128xf32, #tpu.memory_space<vmem>>, %arg14: memref<8x32xf32, #tpu.memory_space<vmem>>, %arg15: memref<8x32xf32, #tpu.memory_space<vmem>>, %arg16: memref<8x32xf32, #tpu.memory_space<vmem>>, %arg17: memref<8x32xf32, #tpu.memory_space<vmem>>) attributes {dimension_semantics = [#tpu.dimension_semantics<parallel>, #tpu.dimension_semantics<arbitrary>], iteration_bounds = array<i64: 1, 2>, scalar_prefetch = 0 : i64, scratch_operands = 5 : i64, tpu.core_type = #tpu.core_type<tc>, window_params = [{transform_indices = @transform_0, window_bounds = array<i64: 4, 8, 16>}, {pipeline_mode = #tpu.pipeline_mode<synchronous>, transform_indices = @transform_1, window_bounds = array<i64: 16, 128>}, {pipeline_mode = #tpu.pipeline_mode<synchronous>, transform_indices = @transform_2, window_bounds = array<i64: 32, 128>}, {pipeline_mode = #tpu.pipeline_mode<synchronous>, transform_indices = @transform_3, window_bounds = array<i64: 1, 128>}, {pipeline_mode = #tpu.pipeline_mode<synchronous>, transform_indices = @transform_4, window_bounds = array<i64: 64, 128>}, {pipeline_mode = #tpu.pipeline_mode<synchronous>, transform_indices = @transform_5, window_bounds = array<i64: 1, 128>}, {pipeline_mode = #tpu.pipeline_mode<synchronous>, transform_indices = @transform_6, window_bounds = array<i64: 32, 16>}, {pipeline_mode = #tpu.pipeline_mode<synchronous>, transform_indices = @transform_7, window_bounds = array<i64: 1, 16>}, {pipeline_mode = #tpu.pipeline_mode<synchronous>, transform_indices = @transform_8, window_bounds = array<i64: 16, 128>}, {pipeline_mode = #tpu.pipeline_mode<synchronous>, transform_indices = @transform_9, window_bounds = array<i64: 1, 128>}, {transform_indices = @transform_10, window_bounds = array<i64: 8, 128>}]} {
    %c0 = arith.constant 0 : index
    %c0_0 = arith.constant 0 : index
    %0 = vector.load %arg4[%c0, %c0_0] : memref<32x128xbf16, #tpu.memory_space<vmem>>, vector<32x128xbf16>
    %c0_1 = arith.constant 0 : index
    %c0_2 = arith.constant 0 : index
    %1 = vector.load %arg6[%c0_1, %c0_2] : memref<64x128xbf16, #tpu.memory_space<vmem>>, vector<64x128xbf16>
    %c0_3 = arith.constant 0 : index
    %c0_4 = arith.constant 0 : index
    %2 = vector.load %arg7[%c0_3, %c0_4] : memref<1x128xf32, #tpu.memory_space<vmem>>, vector<1x128xf32>
    %3 = vector.shape_cast %2 : vector<1x128xf32> to vector<1x128xf32>
    %4 = vector.broadcast %3 : vector<1x128xf32> to vector<8x128xf32>
    %5 = tpu.iota {dimensions = array<i32: 1>} : vector<8x128xi32>
    %c64_i32 = arith.constant 64 : i32
    %6 = vector.broadcast %c64_i32 : i32 to vector<8x128xi32>
    %7 = arith.cmpi sge, %5, %6 : vector<8x128xi32>
    %c96_i32 = arith.constant 96 : i32
    %8 = vector.broadcast %c96_i32 : i32 to vector<8x128xi32>
    %9 = arith.cmpi slt, %5, %8 : vector<8x128xi32>
    %10 = arith.andi %7, %9 : vector<8x128xi1>
    %c0_5 = arith.constant 0 : index
    %c0_6 = arith.constant 0 : index
    %c0_7 = arith.constant 0 : index
    %11 = vector.load %arg2[%c0_5, %c0_6, %c0_7] : memref<4x8x16xf32, #tpu.memory_space<vmem>>, vector<4x8x16xf32>
    %12 = vector.shape_cast %11 : vector<4x8x16xf32> to vector<32x16xf32>
    %13 = arith.truncf %12 : vector<32x16xf32> to vector<32x16xbf16>
    %c0_8 = arith.constant 0 : index
    %c0_9 = arith.constant 0 : index
    %14 = vector.load %arg3[%c0_8, %c0_9] : memref<16x128xbf16, #tpu.memory_space<vmem>>, vector<16x128xbf16>
    %cst = arith.constant dense<0.000000e+00> : vector<32x128xf32>
    %15 = tpu.matmul %13, %14, %cst {dimension_numbers = #tpu.dot_dimension_numbers<[1], [0], [0], [1], [0, 0, 1, 1], [], []>} : vector<32x16xbf16>, vector<16x128xbf16>, vector<32x128xf32> -> vector<32x128xf32>
    %c0_10 = arith.constant 0 : index
    %c0_11 = arith.constant 0 : index
    %16 = vector.load %arg5[%c0_10, %c0_11] : memref<1x128xf32, #tpu.memory_space<vmem>>, vector<1x128xf32>
    %17 = vector.broadcast %16 : vector<1x128xf32> to vector<32x128xf32>
    %18 = arith.addf %15, %17 : vector<32x128xf32>
    %c0_12 = arith.constant 0 : index
    %c0_13 = arith.constant 0 : index
    %19 = vector.load %arg13[%c0_12, %c0_13] : memref<32x128xf32, #tpu.memory_space<vmem>>, vector<32x128xf32>
    tpu.vector_store %arg13[%c0_12, %c0_13], %18 {strides = array<i32>} : memref<32x128xf32, #tpu.memory_space<vmem>>, vector<32x128xf32>,
    %c0_i32 = arith.constant 0 : i32
    %20 = arith.cmpi eq, %arg1, %c0_i32 : i32
    %21 = arith.extui %20 : i1 to i32
    %c0_i32_14 = arith.constant 0 : i32
    %22 = arith.cmpi ne, %21, %c0_i32_14 : i32
    scf.if %22 {
      %cst_73 = arith.constant 0.000000e+00 : f32
      %222 = vector.broadcast %cst_73 : f32 to vector<8x32xf32>
      %c0_74 = arith.constant 0 : index
      %c0_75 = arith.constant 0 : index
      %223 = vector.load %arg14[%c0_74, %c0_75] : memref<8x32xf32, #tpu.memory_space<vmem>>, vector<8x32xf32>
      tpu.vector_store %arg14[%c0_74, %c0_75], %222 {strides = array<i32>} : memref<8x32xf32, #tpu.memory_space<vmem>>, vector<8x32xf32>,
      %c0_76 = arith.constant 0 : index
      %c0_77 = arith.constant 0 : index
      %224 = vector.load %arg15[%c0_76, %c0_77] : memref<8x32xf32, #tpu.memory_space<vmem>>, vector<8x32xf32>
      tpu.vector_store %arg15[%c0_76, %c0_77], %222 {strides = array<i32>} : memref<8x32xf32, #tpu.memory_space<vmem>>, vector<8x32xf32>,
      %c0_78 = arith.constant 0 : index
      %c0_79 = arith.constant 0 : index
      %225 = vector.load %arg16[%c0_78, %c0_79] : memref<8x32xf32, #tpu.memory_space<vmem>>, vector<8x32xf32>
      tpu.vector_store %arg16[%c0_78, %c0_79], %222 {strides = array<i32>} : memref<8x32xf32, #tpu.memory_space<vmem>>, vector<8x32xf32>,
      %c0_80 = arith.constant 0 : index
      %c0_81 = arith.constant 0 : index
      %226 = vector.load %arg17[%c0_80, %c0_81] : memref<8x32xf32, #tpu.memory_space<vmem>>, vector<8x32xf32>
      tpu.vector_store %arg17[%c0_80, %c0_81], %222 {strides = array<i32>} : memref<8x32xf32, #tpu.memory_space<vmem>>, vector<8x32xf32>,
    } else {
    }
    %c0_15 = arith.constant 0 : index
    %c0_16 = arith.constant 0 : index
    %23 = vector.load %arg14[%c0_15, %c0_16] : memref<8x32xf32, #tpu.memory_space<vmem>>, vector<8x32xf32>
    %c0_17 = arith.constant 0 : index
    %c0_18 = arith.constant 0 : index
    %24 = vector.load %arg15[%c0_17, %c0_18] : memref<8x32xf32, #tpu.memory_space<vmem>>, vector<8x32xf32>
    %c0_19 = arith.constant 0 : index
    %c0_20 = arith.constant 0 : index
    %25 = vector.load %arg16[%c0_19, %c0_20] : memref<8x32xf32, #tpu.memory_space<vmem>>, vector<8x32xf32>
    %c0_21 = arith.constant 0 : index
    %c0_22 = arith.constant 0 : index
    %26 = vector.load %arg17[%c0_21, %c0_22] : memref<8x32xf32, #tpu.memory_space<vmem>>, vector<8x32xf32>
    %c0_i32_23 = arith.constant 0 : i32
    %c8_i32 = arith.constant 8 : i32
    %27 = arith.muli %c0_i32_23, %c8_i32 : i32
    %28 = tpu.assume_multiple %27, 8 : i32
    %29 = arith.index_cast %28 : i32 to index
    %c0_24 = arith.constant 0 : index
    %30 = vector.load %arg13[%29, %c0_24] : memref<32x128xf32, #tpu.memory_space<vmem>>, vector<8x128xf32>
    %31 = arith.truncf %23 : vector<8x32xf32> to vector<8x32xbf16>
    %cst_25 = arith.constant dense<0.000000e+00> : vector<8x128xf32>
    %32 = tpu.matmul %31, %0, %cst_25 {dimension_numbers = #tpu.dot_dimension_numbers<[1], [0], [0], [1], [0, 0, 1, 1], [], []>} : vector<8x32xbf16>, vector<32x128xbf16>, vector<8x128xf32> -> vector<8x128xf32>
    %33 = arith.addf %30, %32 : vector<8x128xf32>
    %cst_26 = arith.constant 5.000000e-01 : f32
    %34 = vector.broadcast %cst_26 : f32 to vector<8x128xf32>
    %35 = arith.mulf %34, %33 : vector<8x128xf32>
    %36 = arith.select %10, %33, %35 : vector<8x128xi1>, vector<8x128xf32>
    %37 = math.tanh %36 : vector<8x128xf32>
    %cst_27 = arith.constant 5.000000e-01 : f32
    %38 = vector.broadcast %cst_27 : f32 to vector<8x128xf32>
    %39 = arith.mulf %38, %37 : vector<8x128xf32>
    %cst_28 = arith.constant 5.000000e-01 : f32
    %40 = vector.broadcast %cst_28 : f32 to vector<8x128xf32>
    %41 = arith.addf %39, %40 : vector<8x128xf32>
    %42 = arith.select %10, %37, %41 : vector<8x128xi1>, vector<8x128xf32>
    %43 = vector.extract_strided_slice %42 {offsets = [0, 0], sizes = [8, 32], strides = [1, 1]} : vector<8x128xf32> to vector<8x32xf32>
    %44 = vector.extract_strided_slice %42 {offsets = [0, 32], sizes = [8, 32], strides = [1, 1]} : vector<8x128xf32> to vector<8x32xf32>
    %45 = vector.extract_strided_slice %42 {offsets = [0, 64], sizes = [8, 32], strides = [1, 1]} : vector<8x128xf32> to vector<8x32xf32>
    %46 = vector.extract_strided_slice %42 {offsets = [0, 96], sizes = [8, 32], strides = [1, 1]} : vector<8x128xf32> to vector<8x32xf32>
    %47 = arith.mulf %44, %24 : vector<8x32xf32>
    %48 = arith.mulf %43, %45 : vector<8x32xf32>
    %49 = arith.addf %47, %48 : vector<8x32xf32>
    %50 = math.tanh %49 : vector<8x32xf32>
    %51 = arith.mulf %46, %50 : vector<8x32xf32>
    %52 = tpu.concatenate %51, %25 in 1 : vector<8x32xf32>, vector<8x32xf32> -> vector<8x64xf32>
    %53 = arith.truncf %52 : vector<8x64xf32> to vector<8x64xbf16>
    %cst_29 = arith.constant dense<0.000000e+00> : vector<8x128xf32>
    %54 = tpu.matmul %53, %1, %cst_29 {dimension_numbers = #tpu.dot_dimension_numbers<[1], [0], [0], [1], [0, 0, 1, 1], [], []>} : vector<8x64xbf16>, vector<64x128xbf16>, vector<8x128xf32> -> vector<8x128xf32>
    %55 = arith.addf %54, %4 : vector<8x128xf32>
    %cst_30 = arith.constant 5.000000e-01 : f32
    %56 = vector.broadcast %cst_30 : f32 to vector<8x128xf32>
    %57 = arith.mulf %56, %55 : vector<8x128xf32>
    %58 = arith.select %10, %55, %57 : vector<8x128xi1>, vector<8x128xf32>
    %59 = math.tanh %58 : vector<8x128xf32>
    %cst_31 = arith.constant 5.000000e-01 : f32
    %60 = vector.broadcast %cst_31 : f32 to vector<8x128xf32>
    %61 = arith.mulf %60, %59 : vector<8x128xf32>
    %cst_32 = arith.constant 5.000000e-01 : f32
    %62 = vector.broadcast %cst_32 : f32 to vector<8x128xf32>
    %63 = arith.addf %61, %62 : vector<8x128xf32>
    %64 = arith.select %10, %59, %63 : vector<8x128xi1>, vector<8x128xf32>
    %65 = vector.extract_strided_slice %64 {offsets = [0, 0], sizes = [8, 32], strides = [1, 1]} : vector<8x128xf32> to vector<8x32xf32>
    %66 = vector.extract_strided_slice %64 {offsets = [0, 32], sizes = [8, 32], strides = [1, 1]} : vector<8x128xf32> to vector<8x32xf32>
    %67 = vector.extract_strided_slice %64 {offsets = [0, 64], sizes = [8, 32], strides = [1, 1]} : vector<8x128xf32> to vector<8x32xf32>
    %68 = vector.extract_strided_slice %64 {offsets = [0, 96], sizes = [8, 32], strides = [1, 1]} : vector<8x128xf32> to vector<8x32xf32>
    %69 = arith.mulf %66, %26 : vector<8x32xf32>
    %70 = arith.mulf %65, %67 : vector<8x32xf32>
    %71 = arith.addf %69, %70 : vector<8x32xf32>
    %72 = math.tanh %71 : vector<8x32xf32>
    %73 = arith.mulf %68, %72 : vector<8x32xf32>
    %c1_i32 = arith.constant 1 : i32
    %c8_i32_33 = arith.constant 8 : i32
    %74 = arith.muli %c1_i32, %c8_i32_33 : i32
    %75 = tpu.assume_multiple %74, 8 : i32
    %76 = arith.index_cast %75 : i32 to index
    %c0_34 = arith.constant 0 : index
    %77 = vector.load %arg13[%76, %c0_34] : memref<32x128xf32, #tpu.memory_space<vmem>>, vector<8x128xf32>
    %78 = arith.truncf %51 : vector<8x32xf32> to vector<8x32xbf16>
    %cst_35 = arith.constant dense<0.000000e+00> : vector<8x128xf32>
    %79 = tpu.matmul %78, %0, %cst_35 {dimension_numbers = #tpu.dot_dimension_numbers<[1], [0], [0], [1], [0, 0, 1, 1], [], []>} : vector<8x32xbf16>, vector<32x128xbf16>, vector<8x128xf32> -> vector<8x128xf32>
    %80 = arith.addf %77, %79 : vector<8x128xf32>
    %cst_36 = arith.constant 5.000000e-01 : f32
    %81 = vector.broadcast %cst_36 : f32 to vector<8x128xf32>
    %82 = arith.mulf %81, %80 : vector<8x128xf32>
    %83 = arith.select %10, %80, %82 : vector<8x128xi1>, vector<8x128xf32>
    %84 = math.tanh %83 : vector<8x128xf32>
    %cst_37 = arith.constant 5.000000e-01 : f32
    %85 = vector.broadcast %cst_37 : f32 to vector<8x128xf32>
    %86 = arith.mulf %85, %84 : vector<8x128xf32>
    %cst_38 = arith.constant 5.000000e-01 : f32
    %87 = vector.broadcast %cst_38 : f32 to vector<8x128xf32>
    %88 = arith.addf %86, %87 : vector<8x128xf32>
    %89 = arith.select %10, %84, %88 : vector<8x128xi1>, vector<8x128xf32>
    %90 = vector.extract_strided_slice %89 {offsets = [0, 0], sizes = [8, 32], strides = [1, 1]} : vector<8x128xf32> to vector<8x32xf32>
    %91 = vector.extract_strided_slice %89 {offsets = [0, 32], sizes = [8, 32], strides = [1, 1]} : vector<8x128xf32> to vector<8x32xf32>
    %92 = vector.extract_strided_slice %89 {offsets = [0, 64], sizes = [8, 32], strides = [1, 1]} : vector<8x128xf32> to vector<8x32xf32>
    %93 = vector.extract_strided_slice %89 {offsets = [0, 96], sizes = [8, 32], strides = [1, 1]} : vector<8x128xf32> to vector<8x32xf32>
    %94 = arith.mulf %91, %49 : vector<8x32xf32>
    %95 = arith.mulf %90, %92 : vector<8x32xf32>
    %96 = arith.addf %94, %95 : vector<8x32xf32>
    %97 = math.tanh %96 : vector<8x32xf32>
    %98 = arith.mulf %93, %97 : vector<8x32xf32>
    %99 = tpu.concatenate %98, %73 in 1 : vector<8x32xf32>, vector<8x32xf32> -> vector<8x64xf32>
    %100 = arith.truncf %99 : vector<8x64xf32> to vector<8x64xbf16>
    %cst_39 = arith.constant dense<0.000000e+00> : vector<8x128xf32>
    %101 = tpu.matmul %100, %1, %cst_39 {dimension_numbers = #tpu.dot_dimension_numbers<[1], [0], [0], [1], [0, 0, 1, 1], [], []>} : vector<8x64xbf16>, vector<64x128xbf16>, vector<8x128xf32> -> vector<8x128xf32>
    %102 = arith.addf %101, %4 : vector<8x128xf32>
    %cst_40 = arith.constant 5.000000e-01 : f32
    %103 = vector.broadcast %cst_40 : f32 to vector<8x128xf32>
    %104 = arith.mulf %103, %102 : vector<8x128xf32>
    %105 = arith.select %10, %102, %104 : vector<8x128xi1>, vector<8x128xf32>
    %106 = math.tanh %105 : vector<8x128xf32>
    %cst_41 = arith.constant 5.000000e-01 : f32
    %107 = vector.broadcast %cst_41 : f32 to vector<8x128xf32>
    %108 = arith.mulf %107, %106 : vector<8x128xf32>
    %cst_42 = arith.constant 5.000000e-01 : f32
    %109 = vector.broadcast %cst_42 : f32 to vector<8x128xf32>
    %110 = arith.addf %108, %109 : vector<8x128xf32>
    %111 = arith.select %10, %106, %110 : vector<8x128xi1>, vector<8x128xf32>
    %112 = vector.extract_strided_slice %111 {offsets = [0, 0], sizes = [8, 32], strides = [1, 1]} : vector<8x128xf32> to vector<8x32xf32>
    %113 = vector.extract_strided_slice %111 {offsets = [0, 32], sizes = [8, 32], strides = [1, 1]} : vector<8x128xf32> to vector<8x32xf32>
    %114 = vector.extract_strided_slice %111 {offsets = [0, 64], sizes = [8, 32], strides = [1, 1]} : vector<8x128xf32> to vector<8x32xf32>
    %115 = vector.extract_strided_slice %111 {offsets = [0, 96], sizes = [8, 32], strides = [1, 1]} : vector<8x128xf32> to vector<8x32xf32>
    %116 = arith.mulf %113, %71 : vector<8x32xf32>
    %117 = arith.mulf %112, %114 : vector<8x32xf32>
    %118 = arith.addf %116, %117 : vector<8x32xf32>
    %119 = math.tanh %118 : vector<8x32xf32>
    %120 = arith.mulf %115, %119 : vector<8x32xf32>
    %c2_i32 = arith.constant 2 : i32
    %c8_i32_43 = arith.constant 8 : i32
    %121 = arith.muli %c2_i32, %c8_i32_43 : i32
    %122 = tpu.assume_multiple %121, 8 : i32
    %123 = arith.index_cast %122 : i32 to index
    %c0_44 = arith.constant 0 : index
    %124 = vector.load %arg13[%123, %c0_44] : memref<32x128xf32, #tpu.memory_space<vmem>>, vector<8x128xf32>
    %125 = arith.truncf %98 : vector<8x32xf32> to vector<8x32xbf16>
    %cst_45 = arith.constant dense<0.000000e+00> : vector<8x128xf32>
    %126 = tpu.matmul %125, %0, %cst_45 {dimension_numbers = #tpu.dot_dimension_numbers<[1], [0], [0], [1], [0, 0, 1, 1], [], []>} : vector<8x32xbf16>, vector<32x128xbf16>, vector<8x128xf32> -> vector<8x128xf32>
    %127 = arith.addf %124, %126 : vector<8x128xf32>
    %cst_46 = arith.constant 5.000000e-01 : f32
    %128 = vector.broadcast %cst_46 : f32 to vector<8x128xf32>
    %129 = arith.mulf %128, %127 : vector<8x128xf32>
    %130 = arith.select %10, %127, %129 : vector<8x128xi1>, vector<8x128xf32>
    %131 = math.tanh %130 : vector<8x128xf32>
    %cst_47 = arith.constant 5.000000e-01 : f32
    %132 = vector.broadcast %cst_47 : f32 to vector<8x128xf32>
    %133 = arith.mulf %132, %131 : vector<8x128xf32>
    %cst_48 = arith.constant 5.000000e-01 : f32
    %134 = vector.broadcast %cst_48 : f32 to vector<8x128xf32>
    %135 = arith.addf %133, %134 : vector<8x128xf32>
    %136 = arith.select %10, %131, %135 : vector<8x128xi1>, vector<8x128xf32>
    %137 = vector.extract_strided_slice %136 {offsets = [0, 0], sizes = [8, 32], strides = [1, 1]} : vector<8x128xf32> to vector<8x32xf32>
    %138 = vector.extract_strided_slice %136 {offsets = [0, 32], sizes = [8, 32], strides = [1, 1]} : vector<8x128xf32> to vector<8x32xf32>
    %139 = vector.extract_strided_slice %136 {offsets = [0, 64], sizes = [8, 32], strides = [1, 1]} : vector<8x128xf32> to vector<8x32xf32>
    %140 = vector.extract_strided_slice %136 {offsets = [0, 96], sizes = [8, 32], strides = [1, 1]} : vector<8x128xf32> to vector<8x32xf32>
    %141 = arith.mulf %138, %96 : vector<8x32xf32>
    %142 = arith.mulf %137, %139 : vector<8x32xf32>
    %143 = arith.addf %141, %142 : vector<8x32xf32>
    %144 = math.tanh %143 : vector<8x32xf32>
    %145 = arith.mulf %140, %144 : vector<8x32xf32>
    %146 = tpu.concatenate %145, %120 in 1 : vector<8x32xf32>, vector<8x32xf32> -> vector<8x64xf32>
    %147 = arith.truncf %146 : vector<8x64xf32> to vector<8x64xbf16>
    %cst_49 = arith.constant dense<0.000000e+00> : vector<8x128xf32>
    %148 = tpu.matmul %147, %1, %cst_49 {dimension_numbers = #tpu.dot_dimension_numbers<[1], [0], [0], [1], [0, 0, 1, 1], [], []>} : vector<8x64xbf16>, vector<64x128xbf16>, vector<8x128xf32> -> vector<8x128xf32>
    %149 = arith.addf %148, %4 : vector<8x128xf32>
    %cst_50 = arith.constant 5.000000e-01 : f32
    %150 = vector.broadcast %cst_50 : f32 to vector<8x128xf32>
    %151 = arith.mulf %150, %149 : vector<8x128xf32>
    %152 = arith.select %10, %149, %151 : vector<8x128xi1>, vector<8x128xf32>
    %153 = math.tanh %152 : vector<8x128xf32>
    %cst_51 = arith.constant 5.000000e-01 : f32
    %154 = vector.broadcast %cst_51 : f32 to vector<8x128xf32>
    %155 = arith.mulf %154, %153 : vector<8x128xf32>
    %cst_52 = arith.constant 5.000000e-01 : f32
    %156 = vector.broadcast %cst_52 : f32 to vector<8x128xf32>
    %157 = arith.addf %155, %156 : vector<8x128xf32>
    %158 = arith.select %10, %153, %157 : vector<8x128xi1>, vector<8x128xf32>
    %159 = vector.extract_strided_slice %158 {offsets = [0, 0], sizes = [8, 32], strides = [1, 1]} : vector<8x128xf32> to vector<8x32xf32>
    %160 = vector.extract_strided_slice %158 {offsets = [0, 32], sizes = [8, 32], strides = [1, 1]} : vector<8x128xf32> to vector<8x32xf32>
    %161 = vector.extract_strided_slice %158 {offsets = [0, 64], sizes = [8, 32], strides = [1, 1]} : vector<8x128xf32> to vector<8x32xf32>
    %162 = vector.extract_strided_slice %158 {offsets = [0, 96], sizes = [8, 32], strides = [1, 1]} : vector<8x128xf32> to vector<8x32xf32>
    %163 = arith.mulf %160, %118 : vector<8x32xf32>
    %164 = arith.mulf %159, %161 : vector<8x32xf32>
    %165 = arith.addf %163, %164 : vector<8x32xf32>
    %166 = math.tanh %165 : vector<8x32xf32>
    %167 = arith.mulf %162, %166 : vector<8x32xf32>
    %c3_i32 = arith.constant 3 : i32
    %c8_i32_53 = arith.constant 8 : i32
    %168 = arith.muli %c3_i32, %c8_i32_53 : i32
    %169 = tpu.assume_multiple %168, 8 : i32
    %170 = arith.index_cast %169 : i32 to index
    %c0_54 = arith.constant 0 : index
    %171 = vector.load %arg13[%170, %c0_54] : memref<32x128xf32, #tpu.memory_space<vmem>>, vector<8x128xf32>
    %172 = arith.truncf %145 : vector<8x32xf32> to vector<8x32xbf16>
    %cst_55 = arith.constant dense<0.000000e+00> : vector<8x128xf32>
    %173 = tpu.matmul %172, %0, %cst_55 {dimension_numbers = #tpu.dot_dimension_numbers<[1], [0], [0], [1], [0, 0, 1, 1], [], []>} : vector<8x32xbf16>, vector<32x128xbf16>, vector<8x128xf32> -> vector<8x128xf32>
    %174 = arith.addf %171, %173 : vector<8x128xf32>
    %cst_56 = arith.constant 5.000000e-01 : f32
    %175 = vector.broadcast %cst_56 : f32 to vector<8x128xf32>
    %176 = arith.mulf %175, %174 : vector<8x128xf32>
    %177 = arith.select %10, %174, %176 : vector<8x128xi1>, vector<8x128xf32>
    %178 = math.tanh %177 : vector<8x128xf32>
    %cst_57 = arith.constant 5.000000e-01 : f32
    %179 = vector.broadcast %cst_57 : f32 to vector<8x128xf32>
    %180 = arith.mulf %179, %178 : vector<8x128xf32>
    %cst_58 = arith.constant 5.000000e-01 : f32
    %181 = vector.broadcast %cst_58 : f32 to vector<8x128xf32>
    %182 = arith.addf %180, %181 : vector<8x128xf32>
    %183 = arith.select %10, %178, %182 : vector<8x128xi1>, vector<8x128xf32>
    %184 = vector.extract_strided_slice %183 {offsets = [0, 0], sizes = [8, 32], strides = [1, 1]} : vector<8x128xf32> to vector<8x32xf32>
    %185 = vector.extract_strided_slice %183 {offsets = [0, 32], sizes = [8, 32], strides = [1, 1]} : vector<8x128xf32> to vector<8x32xf32>
    %186 = vector.extract_strided_slice %183 {offsets = [0, 64], sizes = [8, 32], strides = [1, 1]} : vector<8x128xf32> to vector<8x32xf32>
    %187 = vector.extract_strided_slice %183 {offsets = [0, 96], sizes = [8, 32], strides = [1, 1]} : vector<8x128xf32> to vector<8x32xf32>
    %188 = arith.mulf %185, %143 : vector<8x32xf32>
    %189 = arith.mulf %184, %186 : vector<8x32xf32>
    %190 = arith.addf %188, %189 : vector<8x32xf32>
    %191 = math.tanh %190 : vector<8x32xf32>
    %192 = arith.mulf %187, %191 : vector<8x32xf32>
    %193 = tpu.concatenate %192, %167 in 1 : vector<8x32xf32>, vector<8x32xf32> -> vector<8x64xf32>
    %194 = arith.truncf %193 : vector<8x64xf32> to vector<8x64xbf16>
    %cst_59 = arith.constant dense<0.000000e+00> : vector<8x128xf32>
    %195 = tpu.matmul %194, %1, %cst_59 {dimension_numbers = #tpu.dot_dimension_numbers<[1], [0], [0], [1], [0, 0, 1, 1], [], []>} : vector<8x64xbf16>, vector<64x128xbf16>, vector<8x128xf32> -> vector<8x128xf32>
    %196 = arith.addf %195, %4 : vector<8x128xf32>
    %cst_60 = arith.constant 5.000000e-01 : f32
    %197 = vector.broadcast %cst_60 : f32 to vector<8x128xf32>
    %198 = arith.mulf %197, %196 : vector<8x128xf32>
    %199 = arith.select %10, %196, %198 : vector<8x128xi1>, vector<8x128xf32>
    %200 = math.tanh %199 : vector<8x128xf32>
    %cst_61 = arith.constant 5.000000e-01 : f32
    %201 = vector.broadcast %cst_61 : f32 to vector<8x128xf32>
    %202 = arith.mulf %201, %200 : vector<8x128xf32>
    %cst_62 = arith.constant 5.000000e-01 : f32
    %203 = vector.broadcast %cst_62 : f32 to vector<8x128xf32>
    %204 = arith.addf %202, %203 : vector<8x128xf32>
    %205 = arith.select %10, %200, %204 : vector<8x128xi1>, vector<8x128xf32>
    %206 = vector.extract_strided_slice %205 {offsets = [0, 0], sizes = [8, 32], strides = [1, 1]} : vector<8x128xf32> to vector<8x32xf32>
    %207 = vector.extract_strided_slice %205 {offsets = [0, 32], sizes = [8, 32], strides = [1, 1]} : vector<8x128xf32> to vector<8x32xf32>
    %208 = vector.extract_strided_slice %205 {offsets = [0, 64], sizes = [8, 32], strides = [1, 1]} : vector<8x128xf32> to vector<8x32xf32>
    %209 = vector.extract_strided_slice %205 {offsets = [0, 96], sizes = [8, 32], strides = [1, 1]} : vector<8x128xf32> to vector<8x32xf32>
    %210 = arith.mulf %207, %165 : vector<8x32xf32>
    %211 = arith.mulf %206, %208 : vector<8x32xf32>
    %212 = arith.addf %210, %211 : vector<8x32xf32>
    %213 = math.tanh %212 : vector<8x32xf32>
    %214 = arith.mulf %209, %213 : vector<8x32xf32>
    %c4_i32 = arith.constant 4 : i32
    %c0_63 = arith.constant 0 : index
    %c0_64 = arith.constant 0 : index
    %215 = vector.load %arg14[%c0_63, %c0_64] : memref<8x32xf32, #tpu.memory_space<vmem>>, vector<8x32xf32>
    tpu.vector_store %arg14[%c0_63, %c0_64], %192 {strides = array<i32>} : memref<8x32xf32, #tpu.memory_space<vmem>>, vector<8x32xf32>,
    %c0_65 = arith.constant 0 : index
    %c0_66 = arith.constant 0 : index
    %216 = vector.load %arg15[%c0_65, %c0_66] : memref<8x32xf32, #tpu.memory_space<vmem>>, vector<8x32xf32>
    tpu.vector_store %arg15[%c0_65, %c0_66], %190 {strides = array<i32>} : memref<8x32xf32, #tpu.memory_space<vmem>>, vector<8x32xf32>,
    %c0_67 = arith.constant 0 : index
    %c0_68 = arith.constant 0 : index
    %217 = vector.load %arg16[%c0_67, %c0_68] : memref<8x32xf32, #tpu.memory_space<vmem>>, vector<8x32xf32>
    tpu.vector_store %arg16[%c0_67, %c0_68], %214 {strides = array<i32>} : memref<8x32xf32, #tpu.memory_space<vmem>>, vector<8x32xf32>,
    %c0_69 = arith.constant 0 : index
    %c0_70 = arith.constant 0 : index
    %218 = vector.load %arg17[%c0_69, %c0_70] : memref<8x32xf32, #tpu.memory_space<vmem>>, vector<8x32xf32>
    tpu.vector_store %arg17[%c0_69, %c0_70], %212 {strides = array<i32>} : memref<8x32xf32, #tpu.memory_space<vmem>>, vector<8x32xf32>,
    %c1_i32_71 = arith.constant 1 : i32
    %219 = arith.cmpi eq, %arg1, %c1_i32_71 : i32
    %220 = arith.extui %219 : i1 to i32
    %c0_i32_72 = arith.constant 0 : i32
    %221 = arith.cmpi ne, %220, %c0_i32_72 : i32
    scf.if %221 {
      %222 = arith.truncf %214 : vector<8x32xf32> to vector<8x32xbf16>
      %c0_73 = arith.constant 0 : index
      %c0_74 = arith.constant 0 : index
      %223 = vector.load %arg8[%c0_73, %c0_74] : memref<32x16xbf16, #tpu.memory_space<vmem>>, vector<32x16xbf16>
      %cst_75 = arith.constant dense<0.000000e+00> : vector<8x16xf32>
      %224 = tpu.matmul %222, %223, %cst_75 {dimension_numbers = #tpu.dot_dimension_numbers<[1], [0], [0], [1], [0, 0, 1, 1], [], []>} : vector<8x32xbf16>, vector<32x16xbf16>, vector<8x16xf32> -> vector<8x16xf32>
      %c0_76 = arith.constant 0 : index
      %c0_77 = arith.constant 0 : index
      %225 = vector.load %arg9[%c0_76, %c0_77] : memref<1x16xf32, #tpu.memory_space<vmem>>, vector<1x16xf32>
      %226 = vector.broadcast %225 : vector<1x16xf32> to vector<8x16xf32>
      %227 = arith.addf %224, %226 : vector<8x16xf32>
      %228 = arith.truncf %227 : vector<8x16xf32> to vector<8x16xbf16>
      %c0_78 = arith.constant 0 : index
      %c0_79 = arith.constant 0 : index
      %229 = vector.load %arg10[%c0_78, %c0_79] : memref<16x128xbf16, #tpu.memory_space<vmem>>, vector<16x128xbf16>
      %cst_80 = arith.constant dense<0.000000e+00> : vector<8x128xf32>
      %230 = tpu.matmul %228, %229, %cst_80 {dimension_numbers = #tpu.dot_dimension_numbers<[1], [0], [0], [1], [0, 0, 1, 1], [], []>} : vector<8x16xbf16>, vector<16x128xbf16>, vector<8x128xf32> -> vector<8x128xf32>
      %c0_81 = arith.constant 0 : index
      %c0_82 = arith.constant 0 : index
      %231 = vector.load %arg11[%c0_81, %c0_82] : memref<1x128xf32, #tpu.memory_space<vmem>>, vector<1x128xf32>
      %232 = vector.broadcast %231 : vector<1x128xf32> to vector<8x128xf32>
      %233 = arith.addf %230, %232 : vector<8x128xf32>
      %c0_83 = arith.constant 0 : index
      %c0_84 = arith.constant 0 : index
      %234 = vector.load %arg12[%c0_83, %c0_84] : memref<8x128xf32, #tpu.memory_space<vmem>>, vector<8x128xf32>
      tpu.vector_store %arg12[%c0_83, %c0_84], %233 {strides = array<i32>} : memref<8x128xf32, #tpu.memory_space<vmem>>, vector<8x128xf32>,
    } else {
    }
    return
  }
  func.func @transform_0(%arg0: i32, %arg1: i32) -> (i32, i32, i32) {
    %c0_i32 = arith.constant 0 : i32
    %c0_i32_0 = arith.constant 0 : i32
    return %arg1, %arg0, %c0_i32 : i32, i32, i32
  }
  func.func @transform_1(%arg0: i32, %arg1: i32) -> (i32, i32) {
    %c0_i32 = arith.constant 0 : i32
    %c0_i32_0 = arith.constant 0 : i32
    %c0_i32_1 = arith.constant 0 : i32
    return %c0_i32, %c0_i32_0 : i32, i32
  }
  func.func @transform_2(%arg0: i32, %arg1: i32) -> (i32, i32) {
    %c0_i32 = arith.constant 0 : i32
    %c0_i32_0 = arith.constant 0 : i32
    %c0_i32_1 = arith.constant 0 : i32
    return %c0_i32, %c0_i32_0 : i32, i32
  }
  func.func @transform_3(%arg0: i32, %arg1: i32) -> (i32, i32) {
    %c0_i32 = arith.constant 0 : i32
    %c0_i32_0 = arith.constant 0 : i32
    %c0_i32_1 = arith.constant 0 : i32
    return %c0_i32, %c0_i32_0 : i32, i32
  }
  func.func @transform_4(%arg0: i32, %arg1: i32) -> (i32, i32) {
    %c0_i32 = arith.constant 0 : i32
    %c0_i32_0 = arith.constant 0 : i32
    %c0_i32_1 = arith.constant 0 : i32
    return %c0_i32, %c0_i32_0 : i32, i32
  }
  func.func @transform_5(%arg0: i32, %arg1: i32) -> (i32, i32) {
    %c0_i32 = arith.constant 0 : i32
    %c0_i32_0 = arith.constant 0 : i32
    %c0_i32_1 = arith.constant 0 : i32
    return %c0_i32, %c0_i32_0 : i32, i32
  }
  func.func @transform_6(%arg0: i32, %arg1: i32) -> (i32, i32) {
    %c0_i32 = arith.constant 0 : i32
    %c0_i32_0 = arith.constant 0 : i32
    %c0_i32_1 = arith.constant 0 : i32
    return %c0_i32, %c0_i32_0 : i32, i32
  }
  func.func @transform_7(%arg0: i32, %arg1: i32) -> (i32, i32) {
    %c0_i32 = arith.constant 0 : i32
    %c0_i32_0 = arith.constant 0 : i32
    %c0_i32_1 = arith.constant 0 : i32
    return %c0_i32, %c0_i32_0 : i32, i32
  }
  func.func @transform_8(%arg0: i32, %arg1: i32) -> (i32, i32) {
    %c0_i32 = arith.constant 0 : i32
    %c0_i32_0 = arith.constant 0 : i32
    %c0_i32_1 = arith.constant 0 : i32
    return %c0_i32, %c0_i32_0 : i32, i32
  }
  func.func @transform_9(%arg0: i32, %arg1: i32) -> (i32, i32) {
    %c0_i32 = arith.constant 0 : i32
    %c0_i32_0 = arith.constant 0 : i32
    %c0_i32_1 = arith.constant 0 : i32
    return %c0_i32, %c0_i32_0 : i32, i32
  }
  func.func @transform_10(%arg0: i32, %arg1: i32) -> (i32, i32) {
    %c0_i32 = arith.constant 0 : i32
    %c0_i32_0 = arith.constant 0 : i32
    return %arg0, %c0_i32 : i32, i32
  }
}

</mosaic_0001>

<llo_original>
// kernel: tpu_custom_call.1
$region0: #{tpu_custom_call.1}
  #allocation0 [shape = 'u32[]', space=smem, size = 0x4, offset = 0x4, fixed_abs, tag = 'smem constant byte address 0x4 - core index']
  #allocation1 [shape = 'u32[144,128]{1,0:T(1,128)}', space=vmem, size = 0x12000, scoped, tag = 'internal scratch']
  #allocation2 [shape = 'f32[32,128]{1,0:T(8,128)}', space=vmem, size = 0x4000, scoped, tag = 'scratch operand']
  #allocation3 [shape = 'f32[8,32]{1,0:T(8,128)}', space=vmem, size = 0x1000, scoped, tag = 'scratch operand']
  #allocation4 [shape = 'f32[8,32]{1,0:T(8,128)}', space=vmem, size = 0x1000, scoped, tag = 'scratch operand']
  #allocation5 [shape = 'f32[8,32]{1,0:T(8,128)}', space=vmem, size = 0x1000, scoped, tag = 'scratch operand']
  #allocation6 [shape = 'f32[8,32]{1,0:T(8,128)}', space=vmem, size = 0x1000, scoped, tag = 'scratch operand']
  %s0 = inlined_call_operand.hbm [shape: f32[8,8,16], index: 0, kind: input, shape index: {}]
  %s1 = inlined_call_operand.hbm [shape: bf16[16,128], index: 1, kind: input, shape index: {}]
  %s2 = inlined_call_operand.hbm [shape: bf16[32,128], index: 2, kind: input, shape index: {}]
  %s3 = inlined_call_operand.vmem [shape: f32[1,128], index: 3, kind: input, shape index: {}]
  %s4 = inlined_call_operand.vmem [shape: bf16[64,128], index: 4, kind: input, shape index: {}]
  %s5 = inlined_call_operand.vmem [shape: f32[1,128], index: 5, kind: input, shape index: {}]
  %s6 = inlined_call_operand.vmem [shape: bf16[32,16], index: 6, kind: input, shape index: {}]
  %s7 = inlined_call_operand.hbm [shape: f32[1,16], index: 7, kind: input, shape index: {}]
  %s8 = inlined_call_operand.vmem [shape: bf16[16,128], index: 8, kind: input, shape index: {}]
  %s9 = inlined_call_operand.vmem [shape: f32[1,128], index: 9, kind: input, shape index: {}]
  %s10 = inlined_call_operand.hbm [shape: f32[8,128], index: 10, kind: output, shape index: {}]
  %s11 = sld [smem:[#allocation0]]
  $region97: #{tpu_custom_call.1} parent=0
    _
  %s13 = ssub.s32 1, %s11
  %s14 = scalar_select 0, %s13, %s11
  $region1: #{tpu_custom_call.1} parent=0
    #allocation7 [shape = 'u8[32768]{0}', space=vmem, size = 0x8000, scoped, tag = 'input window, operand 0']
    #allocation8 [shape = 's32[2]{0}', space=sflag, size = 0x8, scoped, tag = 'scoped memory for tpu_custom_call.1']
    #allocation9 [shape = 's32[2]{0}', space=sflag, size = 0x8, scoped, tag = 'scoped memory for tpu_custom_call.1']
    #allocation10 [shape = 'u8[4096]{0}', space=vmem, size = 0x1000, scoped, tag = 'input window, operand 1, single buffered']
    #allocation11 [shape = 's32[1]{0}', space=sflag, size = 0x4, scoped, tag = 'scoped memory for tpu_custom_call.1']
    #allocation12 [shape = 'u8[8192]{0}', space=vmem, size = 0x2000, scoped, tag = 'input window, operand 2, single buffered']
    #allocation13 [shape = 'u8[512]{0}', space=vmem, size = 0x400, scoped, tag = 'input window, operand 7, single buffered']
    #allocation14 [shape = 's32[1]{0}', space=sflag, size = 0x4, scoped, tag = 'scoped memory for tpu_custom_call.1']
    #allocation15 [shape = 'u8[4096]{0}', space=vmem, size = 0x1000, scoped, tag = 'output window, operand 0, single buffered']
    %15 = vsyncpa [#allocation8], 0
    %s16 = scalar_lea.sflag [#allocation8], 1
    %17 = vsyncpa %s16, 0
    %18 = vsyncpa [#allocation11], 0
    %19 = vsyncpa [#allocation14], 0
    %20 = vsyncpa [#allocation9], 0
    loop: start=0, step=1, limit=4
    $region2: #{tpu_custom_call.1} parent=1 // loop_pre_header
      _
    $region3: #{tpu_custom_call.1} parent=1 // loop_header
      %s22 = sphi 0, %s26
      %p23 = scmp.ge.s32.totalorder %s22, 4
      %s29 = sphi 0, %s41
      %s30 = sphi 0, %s37
      %s31 = sphi 0, %s29
      %s32 = sphi 0, %s30
      %s33 = sphi 0, %s31
      %s34 = sphi 0, %s32
      %s46 = sphi 0, %s48
      %s49 = sphi 0, %s46
      %s50 = sphi 0, %s49
      %s66 = sphi 0, %s50
      %s70 = sphi 0, %s70
      %s72 = sphi 0, %s70
      %s73 = sphi 0, %s72
      %s87 = sphi 0, %s73
      %s91 = sphi 0, %s91
      %s93 = sphi 0, %s91
      %s94 = sphi 0, %s93
      %s108 = sphi 0, %s94
      %s112 = sphi 0, %s112
      %s114 = sphi 0, %s112
      %s115 = sphi 0, %s114
      %s129 = sphi 0, %s115
      %s133 = sphi 0, %s133
      %s135 = sphi 0, %s133
      %s136 = sphi 0, %s135
      %s150 = sphi 0, %s136
      %s154 = sphi 0, %s154
      %s156 = sphi 0, %s154
      %s157 = sphi 0, %s156
      %s171 = sphi 0, %s157
      %s175 = sphi 0, %s175
      %s177 = sphi 0, %s175
      %s178 = sphi 0, %s177
      %s192 = sphi 0, %s178
      %s196 = sphi 0, %s196
      %s198 = sphi 0, %s196
      %s199 = sphi 0, %s198
      %s213 = sphi 0, %s199
      %s217 = sphi 0, %s217
      %s219 = sphi 0, %s217
      %s220 = sphi 0, %s219
      %s234 = sphi 0, %s220
      %s238 = sphi 0, %s238
      %s240 = sphi 0, %s238
      %s241 = sphi 0, %s240
      %s255 = sphi 0, %s241
      %s261 = sphi 0, %s263
      %s264 = sphi 0, %s261
      %s265 = sphi 0, %s264
      %s281 = sphi 0, %s265
    $region4: #{tpu_custom_call.1} parent=1 // loop_header_branch
      %25 = sbr.rel (%p23) target = $region8
    $region5: #{tpu_custom_call.1} parent=1 // loop_body
      %s27 = ssub.s32 %s22, 1
      %s28 = ssub.s32 %s22, 2
      %s35 = sadd.s32 1, %s30
      %p36 = scmp.ge.s32.totalorder %s35, 2
      %s37 = scalar_select %p36, 0, %s35
      %s38 = sadd.s32 1, %s29
      %s39 = scalar_select %p36, %s38, %s29
      %p40 = scmp.ge.s32.totalorder %s39, 1
      %s41 = scalar_select %p40, 0, %s39
      %s42 = ssub.s32 %s30, %s37
      %s43 = ssub.s32 %s29, %s41
      %s44 = sor.u32 %s42, %s43
      %p45 = scmp.eq.s32.totalorder %s44, 0
      %s47 = sadd.s32 %s46, 1
      %s48 = scalar_select %p45, %s46, %s47
      %p51 = pneg %p45
      %p52 = scmp.eq.s32.totalorder %s22, 1
      %p53 = por %p51, %p52
      %p54 = scmp.ne.s32.totalorder %s46, %s49
      %p55 = scmp.eq.s32.totalorder %s22, 0
      %p56 = por %p54, %p55
      %p57 = scmp.ne.s32.totalorder %s46, %s49
      %p58 = scmp.eq.s32.totalorder %s27, 1
      %p59 = por %p57, %p58
      %p60 = scmp.ne.s32.totalorder %s49, %s50
      %p61 = scmp.eq.s32.totalorder %s27, 0
      %p62 = por %p60, %p61
      %p63 = scmp.ne.s32.totalorder %s49, %s50
      %p64 = scmp.eq.s32.totalorder %s28, 1
      %p65 = por %p63, %p64
      %p67 = scmp.ne.s32.totalorder %s50, %s66
      %p68 = scmp.eq.s32.totalorder %s28, 0
      %p69 = por %p67, %p68
      %s71 = sadd.s32 %s70, 1
      %p74 = scmp.eq.s32.totalorder %s22, 1
      %p75 = scmp.ne.s32.totalorder %s70, %s72
      %p76 = scmp.eq.s32.totalorder %s22, 0
      %p77 = por %p75, %p76
      %p78 = scmp.ne.s32.totalorder %s70, %s72
      %p79 = scmp.eq.s32.totalorder %s27, 1
      %p80 = por %p78, %p79
      %p81 = scmp.ne.s32.totalorder %s72, %s73
      %p82 = scmp.eq.s32.totalorder %s27, 0
      %p83 = por %p81, %p82
      %p84 = scmp.ne.s32.totalorder %s72, %s73
      %p85 = scmp.eq.s32.totalorder %s28, 1
      %p86 = por %p84, %p85
      %p88 = scmp.ne.s32.totalorder %s73, %s87
      %p89 = scmp.eq.s32.totalorder %s28, 0
      %p90 = por %p88, %p89
      %s92 = sadd.s32 %s91, 1
      %p95 = scmp.eq.s32.totalorder %s22, 1
      %p96 = scmp.ne.s32.totalorder %s91, %s93
      %p97 = scmp.eq.s32.totalorder %s22, 0
      %p98 = por %p96, %p97
      %p99 = scmp.ne.s32.totalorder %s91, %s93
      %p100 = scmp.eq.s32.totalorder %s27, 1
      %p101 = por %p99, %p100
      %p102 = scmp.ne.s32.totalorder %s93, %s94
      %p103 = scmp.eq.s32.totalorder %s27, 0
      %p104 = por %p102, %p103
      %p105 = scmp.ne.s32.totalorder %s93, %s94
      %p106 = scmp.eq.s32.totalorder %s28, 1
      %p107 = por %p105, %p106
      %p109 = scmp.ne.s32.totalorder %s94, %s108
      %p110 = scmp.eq.s32.totalorder %s28, 0
      %p111 = por %p109, %p110
      %s113 = sadd.s32 %s112, 1
      %p116 = scmp.eq.s32.totalorder %s22, 1
      %p117 = scmp.ne.s32.totalorder %s112, %s114
      %p118 = scmp.eq.s32.totalorder %s22, 0
      %p119 = por %p117, %p118
      %p120 = scmp.ne.s32.totalorder %s112, %s114
      %p121 = scmp.eq.s32.totalorder %s27, 1
      %p122 = por %p120, %p121
      %p123 = scmp.ne.s32.totalorder %s114, %s115
      %p124 = scmp.eq.s32.totalorder %s27, 0
      %p125 = por %p123, %p124
      %p126 = scmp.ne.s32.totalorder %s114, %s115
      %p127 = scmp.eq.s32.totalorder %s28, 1
      %p128 = por %p126, %p127
      %p130 = scmp.ne.s32.totalorder %s115, %s129
      %p131 = scmp.eq.s32.totalorder %s28, 0
      %p132 = por %p130, %p131
      %s134 = sadd.s32 %s133, 1
      %p137 = scmp.eq.s32.totalorder %s22, 1
      %p138 = scmp.ne.s32.totalorder %s133, %s135
      %p139 = scmp.eq.s32.totalorder %s22, 0
      %p140 = por %p138, %p139
      %p141 = scmp.ne.s32.totalorder %s133, %s135
      %p142 = scmp.eq.s32.totalorder %s27, 1
      %p143 = por %p141, %p142
      %p144 = scmp.ne.s32.totalorder %s135, %s136
      %p145 = scmp.eq.s32.totalorder %s27, 0
      %p146 = por %p144, %p145
      %p147 = scmp.ne.s32.totalorder %s135, %s136
      %p148 = scmp.eq.s32.totalorder %s28, 1
      %p149 = por %p147, %p148
      %p151 = scmp.ne.s32.totalorder %s136, %s150
      %p152 = scmp.eq.s32.totalorder %s28, 0
      %p153 = por %p151, %p152
      %s155 = sadd.s32 %s154, 1
      %p158 = scmp.eq.s32.totalorder %s22, 1
      %p159 = scmp.ne.s32.totalorder %s154, %s156
      %p160 = scmp.eq.s32.totalorder %s22, 0
      %p161 = por %p159, %p160
      %p162 = scmp.ne.s32.totalorder %s154, %s156
      %p163 = scmp.eq.s32.totalorder %s27, 1
      %p164 = por %p162, %p163
      %p165 = scmp.ne.s32.totalorder %s156, %s157
      %p166 = scmp.eq.s32.totalorder %s27, 0
      %p167 = por %p165, %p166
      %p168 = scmp.ne.s32.totalorder %s156, %s157
      %p169 = scmp.eq.s32.totalorder %s28, 1
      %p170 = por %p168, %p169
      %p172 = scmp.ne.s32.totalorder %s157, %s171
      %p173 = scmp.eq.s32.totalorder %s28, 0
      %p174 = por %p172, %p173
      %s176 = sadd.s32 %s175, 1
      %p179 = scmp.eq.s32.totalorder %s22, 1
      %p180 = scmp.ne.s32.totalorder %s175, %s177
      %p181 = scmp.eq.s32.totalorder %s22, 0
      %p182 = por %p180, %p181
      %p183 = scmp.ne.s32.totalorder %s175, %s177
      %p184 = scmp.eq.s32.totalorder %s27, 1
      %p185 = por %p183, %p184
      %p186 = scmp.ne.s32.totalorder %s177, %s178
      %p187 = scmp.eq.s32.totalorder %s27, 0
      %p188 = por %p186, %p187
      %p189 = scmp.ne.s32.totalorder %s177, %s178
      %p190 = scmp.eq.s32.totalorder %s28, 1
      %p191 = por %p189, %p190
      %p193 = scmp.ne.s32.totalorder %s178, %s192
      %p194 = scmp.eq.s32.totalorder %s28, 0
      %p195 = por %p193, %p194
      %s197 = sadd.s32 %s196, 1
      %p200 = scmp.eq.s32.totalorder %s22, 1
      %p201 = scmp.ne.s32.totalorder %s196, %s198
      %p202 = scmp.eq.s32.totalorder %s22, 0
      %p203 = por %p201, %p202
      %p204 = scmp.ne.s32.totalorder %s196, %s198
      %p205 = scmp.eq.s32.totalorder %s27, 1
      %p206 = por %p204, %p205
      %p207 = scmp.ne.s32.totalorder %s198, %s199
      %p208 = scmp.eq.s32.totalorder %s27, 0
      %p209 = por %p207, %p208
      %p210 = scmp.ne.s32.totalorder %s198, %s199
      %p211 = scmp.eq.s32.totalorder %s28, 1
      %p212 = por %p210, %p211
      %p214 = scmp.ne.s32.totalorder %s199, %s213
      %p215 = scmp.eq.s32.totalorder %s28, 0
      %p216 = por %p214, %p215
      %s218 = sadd.s32 %s217, 1
      %p221 = scmp.eq.s32.totalorder %s22, 1
      %p222 = scmp.ne.s32.totalorder %s217, %s219
      %p223 = scmp.eq.s32.totalorder %s22, 0
      %p224 = por %p222, %p223
      %p225 = scmp.ne.s32.totalorder %s217, %s219
      %p226 = scmp.eq.s32.totalorder %s27, 1
      %p227 = por %p225, %p226
      %p228 = scmp.ne.s32.totalorder %s219, %s220
      %p229 = scmp.eq.s32.totalorder %s27, 0
      %p230 = por %p228, %p229
      %p231 = scmp.ne.s32.totalorder %s219, %s220
      %p232 = scmp.eq.s32.totalorder %s28, 1
      %p233 = por %p231, %p232
      %p235 = scmp.ne.s32.totalorder %s220, %s234
      %p236 = scmp.eq.s32.totalorder %s28, 0
      %p237 = por %p235, %p236
      %s239 = sadd.s32 %s238, 1
      %p242 = scmp.eq.s32.totalorder %s22, 1
      %p243 = scmp.ne.s32.totalorder %s238, %s240
      %p244 = scmp.eq.s32.totalorder %s22, 0
      %p245 = por %p243, %p244
      %p246 = scmp.ne.s32.totalorder %s238, %s240
      %p247 = scmp.eq.s32.totalorder %s27, 1
      %p248 = por %p246, %p247
      %p249 = scmp.ne.s32.totalorder %s240, %s241
      %p250 = scmp.eq.s32.totalorder %s27, 0
      %p251 = por %p249, %p250
      %p252 = scmp.ne.s32.totalorder %s240, %s241
      %p253 = scmp.eq.s32.totalorder %s28, 1
      %p254 = por %p252, %p253
      %p256 = scmp.ne.s32.totalorder %s241, %s255
      %p257 = scmp.eq.s32.totalorder %s28, 0
      %p258 = por %p256, %p257
      %s259 = ssub.s32 %s29, %s41
      %p260 = scmp.eq.s32.totalorder %s259, 0
      %s262 = sadd.s32 %s261, 1
      %s263 = scalar_select %p260, %s261, %s262
      %p266 = pneg %p260
      %p267 = scmp.eq.s32.totalorder %s22, 1
      %p268 = por %p266, %p267
      %p269 = scmp.ne.s32.totalorder %s261, %s264
      %p270 = scmp.eq.s32.totalorder %s22, 0
      %p271 = por %p269, %p270
      %p272 = scmp.ne.s32.totalorder %s261, %s264
      %p273 = scmp.eq.s32.totalorder %s27, 1
      %p274 = por %p272, %p273
      %p275 = scmp.ne.s32.totalorder %s264, %s265
      %p276 = scmp.eq.s32.totalorder %s27, 0
      %p277 = por %p275, %p276
      %p278 = scmp.ne.s32.totalorder %s264, %s265
      %p279 = scmp.eq.s32.totalorder %s28, 1
      %p280 = por %p278, %p279
      %p282 = scmp.ne.s32.totalorder %s265, %s281
      %p283 = scmp.eq.s32.totalorder %s28, 0
      %p284 = por %p282, %p283
      %p285 = scmp.le.s32.totalorder 1, %s22
      %p286 = scmp.lt.s32.totalorder %s22, 3
      %p287 = pnand %p285, %p286
      %p288 = pneg %p287
      // Predicated region
      $region9: #{tpu_custom_call.1} parent=5 // pred_check
        _
      $region10: #{tpu_custom_call.1} parent=5 // pred_check_branch
        %290 = sbr.rel (%p287) target = $region12
      $region11: #{tpu_custom_call.1} parent=5 // pred_region
        %s291 = ssub.s32 %s22, 1
        // Predicated region
        $region13: #{tpu_custom_call.1} parent=11 // pred_check
          %p292 = pneg %p83
        $region14: #{tpu_custom_call.1} parent=11 // pred_check_branch
          %294 = sbr.rel (%p292) target = $region16
        $region15: #{tpu_custom_call.1} parent=11 // pred_region
          %s296 = ssub.s32 128, 128
          %297 = vsyncadd [#allocation11], %s296
          %s298 = sshll.u32 [#allocation10], 4
          %s299 = int_to_ptr.vmem [resolvable:$true] %s298
          %304 = dma.hbm_to_vmem [thread:$0]  %s1, 128, %s299, [#allocation11], 64, 64, 4
        $region16: #{tpu_custom_call.1} parent=11 // pred_fallthru
          _
        // Predicated region
        $region17: #{tpu_custom_call.1} parent=11 // pred_check
          %p305 = pneg %p104
        $region18: #{tpu_custom_call.1} parent=11 // pred_check_branch
          %307 = sbr.rel (%p305) target = $region20
        $region19: #{tpu_custom_call.1} parent=11 // pred_region
          %s309 = ssub.s32 256, 256
          %310 = vsyncadd [#allocation11], %s309
          %s311 = sshll.u32 [#allocation12], 4
          %s312 = int_to_ptr.vmem [resolvable:$true] %s311
          %317 = dma.hbm_to_vmem [thread:$0]  %s2, 256, %s312, [#allocation11], 64, 64, 4
        $region20: #{tpu_custom_call.1} parent=11 // pred_fallthru
          _
        // Predicated region
        $region21: #{tpu_custom_call.1} parent=11 // pred_check
          %p318 = pneg %p125
        $region22: #{tpu_custom_call.1} parent=11 // pred_check_branch
          %320 = sbr.rel (%p318) target = $region24
        $region23: #{tpu_custom_call.1} parent=11 // pred_region
          _
        $region24: #{tpu_custom_call.1} parent=11 // pred_fallthru
          _
        // Predicated region
        $region25: #{tpu_custom_call.1} parent=11 // pred_check
          %p321 = pneg %p146
        $region26: #{tpu_custom_call.1} parent=11 // pred_check_branch
          %323 = sbr.rel (%p321) target = $region28
        $region27: #{tpu_custom_call.1} parent=11 // pred_region
          _
        $region28: #{tpu_custom_call.1} parent=11 // pred_fallthru
          _
        // Predicated region
        $region29: #{tpu_custom_call.1} parent=11 // pred_check
          %p324 = pneg %p167
        $region30: #{tpu_custom_call.1} parent=11 // pred_check_branch
          %326 = sbr.rel (%p324) target = $region32
        $region31: #{tpu_custom_call.1} parent=11 // pred_region
          _
        $region32: #{tpu_custom_call.1} parent=11 // pred_fallthru
          _
        // Predicated region
        $region33: #{tpu_custom_call.1} parent=11 // pred_check
          %p327 = pneg %p188
        $region34: #{tpu_custom_call.1} parent=11 // pred_check_branch
          %329 = sbr.rel (%p327) target = $region36
        $region35: #{tpu_custom_call.1} parent=11 // pred_region
          _
        $region36: #{tpu_custom_call.1} parent=11 // pred_fallthru
          _
        // Predicated region
        $region37: #{tpu_custom_call.1} parent=11 // pred_check
          %p330 = pneg %p209
        $region38: #{tpu_custom_call.1} parent=11 // pred_check_branch
          %332 = sbr.rel (%p330) target = $region40
        $region39: #{tpu_custom_call.1} parent=11 // pred_region
          %s334 = ssub.s32 16, 16
          %335 = vsyncadd [#allocation14], %s334
          %s337 = sshll.u32 [#allocation13], 4
          %s338 = int_to_ptr.vmem [resolvable:$true] %s337
          %340 = dma.hbm_to_vmem [thread:$0]  %s7, 16, %s338, [#allocation14]
        $region40: #{tpu_custom_call.1} parent=11 // pred_fallthru
          _
        // Predicated region
        $region41: #{tpu_custom_call.1} parent=11 // pred_check
          %p341 = pneg %p230
        $region42: #{tpu_custom_call.1} parent=11 // pred_check_branch
          %343 = sbr.rel (%p341) target = $region44
        $region43: #{tpu_custom_call.1} parent=11 // pred_region
          _
        $region44: #{tpu_custom_call.1} parent=11 // pred_fallthru
          _
        // Predicated region
        $region45: #{tpu_custom_call.1} parent=11 // pred_check
          %p344 = pneg %p251
        $region46: #{tpu_custom_call.1} parent=11 // pred_check_branch
          %346 = sbr.rel (%p344) target = $region48
        $region47: #{tpu_custom_call.1} parent=11 // pred_region
          _
        $region48: #{tpu_custom_call.1} parent=11 // pred_fallthru
          _
      $region12: #{tpu_custom_call.1} parent=5 // pred_fallthru
        _
      %p347 = scmp.lt.s32.totalorder %s22, 2
      // Predicated region
      $region49: #{tpu_custom_call.1} parent=5 // pred_check
        %p348 = pneg %p347
      $region50: #{tpu_custom_call.1} parent=5 // pred_check_branch
        %350 = sbr.rel (%p348) target = $region52
      $region51: #{tpu_custom_call.1} parent=5 // pred_region
        // Predicated region
        $region53: #{tpu_custom_call.1} parent=51 // pred_check
          %p351 = pneg %p56
        $region54: #{tpu_custom_call.1} parent=51 // pred_check_branch
          %353 = sbr.rel (%p351) target = $region56
        $region55: #{tpu_custom_call.1} parent=51 // pred_region
          %s354 = sand.u32 %s46, 1
          %s355 = scalar_lea.sflag [#allocation8], %s354
          %s356 = sand.u32 %s46, 1
          %s357 = smul.addr %s356, 32
          %s358 = scalar_lea.vmem [#allocation7], %s357
          %s359 = smul.u32 4, %s30
          %s361 = ssub.s32 512, 512
          %362 = vsyncadd %s355, %s361
          %s363 = sadd.s32 %s29, %s359
          %s364 = smul.addr %s363, 128
          %s365 = scalar_lea.hbm %s0, %s364
          %s366 = sshll.u32 %s358, 4
          %s367 = int_to_ptr.vmem [resolvable:$true] %s366
          %372 = dma.hbm_to_vmem [thread:$0]  %s365, 512, %s367, %s355, 128, 128, 8
        $region56: #{tpu_custom_call.1} parent=51 // pred_fallthru
          _
      $region52: #{tpu_custom_call.1} parent=5 // pred_fallthru
        _
      %p373 = scmp.le.s32.totalorder 1, %s22
      %p374 = scmp.lt.s32.totalorder %s22, 3
      %p375 = pnand %p373, %p374
      %p376 = pneg %p375
      // Predicated region
      $region57: #{tpu_custom_call.1} parent=5 // pred_check
        _
      $region58: #{tpu_custom_call.1} parent=5 // pred_check_branch
        %378 = sbr.rel (%p375) target = $region60
      $region59: #{tpu_custom_call.1} parent=5 // pred_region
        %s379 = ssub.s32 %s22, 1
        %s380 = sand.u32 %s49, 1
        %s381 = scalar_lea.sflag [#allocation8], %s380
        %s382 = sand.u32 %s49, 1
        %s383 = smul.addr %s382, 32
        %s384 = scalar_lea.vmem [#allocation7], %s383
        // Predicated region
        $region61: #{tpu_custom_call.1} parent=59 // pred_check
          %p385 = pneg %p62
        $region62: #{tpu_custom_call.1} parent=59 // pred_check_branch
          %387 = sbr.rel (%p385) target = $region64
        $region63: #{tpu_custom_call.1} parent=59 // pred_region
          %388 = dma.done %s381, 512
        $region64: #{tpu_custom_call.1} parent=59 // pred_fallthru
          _
        // Predicated region
        $region65: #{tpu_custom_call.1} parent=59 // pred_check
          %p389 = pneg %p83
        $region66: #{tpu_custom_call.1} parent=59 // pred_check_branch
          %391 = sbr.rel (%p389) target = $region68
        $region67: #{tpu_custom_call.1} parent=59 // pred_region
          %392 = dma.done [#allocation11], 128
        $region68: #{tpu_custom_call.1} parent=59 // pred_fallthru
          _
        // Predicated region
        $region69: #{tpu_custom_call.1} parent=59 // pred_check
          %p393 = pneg %p104
        $region70: #{tpu_custom_call.1} parent=59 // pred_check_branch
          %395 = sbr.rel (%p393) target = $region72
        $region71: #{tpu_custom_call.1} parent=59 // pred_region
          %396 = dma.done [#allocation11], 256
        $region72: #{tpu_custom_call.1} parent=59 // pred_fallthru
          _
        // Predicated region
        $region73: #{tpu_custom_call.1} parent=59 // pred_check
          %p397 = pneg %p209
        $region74: #{tpu_custom_call.1} parent=59 // pred_check_branch
          %399 = sbr.rel (%p397) target = $region76
        $region75: #{tpu_custom_call.1} parent=59 // pred_region
          %400 = dma.done [#allocation14], 16
        $region76: #{tpu_custom_call.1} parent=59 // pred_fallthru
          _
        %s401 = sand.u32 %s49, 1
        %s402 = scalar_lea.sflag [#allocation8], %s401
        %s403 = sand.u32 %s49, 1
        %s404 = smul.addr %s403, 32
        %s405 = scalar_lea.vmem [#allocation7], %s404
        %p406 = pneg %p62
        %p407 = pneg %p59
        %p408 = pneg %p83
        %p409 = pneg %p80
        %p410 = pneg %p104
        %p411 = pneg %p101
        %p412 = pneg %p125
        %p413 = pneg %p122
        %p414 = pneg %p146
        %p415 = pneg %p143
        %p416 = pneg %p167
        %p417 = pneg %p164
        %p418 = pneg %p188
        %p419 = pneg %p185
        %p420 = pneg %p209
        %p421 = pneg %p206
        %p422 = pneg %p230
        %p423 = pneg %p227
        %p424 = pneg %p251
        %p425 = pneg %p248
        %p426 = pneg %p277
        %p427 = pneg %p274
        %s428 = smul.u32 4, %s32
        %v430 = vld [vmem:[#allocation12] sm:$0xf]
        %v431 = vld [vmem:[#allocation12 + $0x4] sm:$0xf]
        %v432 = vld [vmem:[#allocation12 + $0x8] sm:$0xf]
        %v433 = vld [vmem:[#allocation12 + $0xc] sm:$0xf]
        %v434 = vld [vmem:[%s4] sm:$0xf]
        %v435 = vld [vmem:[%s4 + $0x4] sm:$0xf]
        %v436 = vld [vmem:[%s4 + $0x8] sm:$0xf]
        %v437 = vld [vmem:[%s4 + $0xc] sm:$0xf]
        %v438 = vld [vmem:[%s4 + $0x10] sm:$0xf]
        %v439 = vld [vmem:[%s4 + $0x14] sm:$0xf]
        %v440 = vld [vmem:[%s4 + $0x18] sm:$0xf]
        %v441 = vld [vmem:[%s4 + $0x1c] sm:$0xf]
        %v442 = vld [vmem:[%s5] sm:$0x1]
        %v444 = vlaneseq
        %v445 = vshrl.u32 %v444, 7
        %v446 = vsub.s32 0, %v445
        %v447 = vrot.slane %v442, %v446
        %v449 = vlaneseq
        %v450 = vand.u32 %v449, 127
        %vm451 = vcmp.ge.s32.totalorder %v450, 64
        %vm452 = vcmp.lt.s32.totalorder %v450, 96
        %vm453 = vmand %vm451, %vm452
        %v454 = vld [vmem:[%s384] sm:$0xff]
        %v455 = vld [vmem:[%s384 + $0x8] sm:$0xff]
        %v456 = vld [vmem:[%s384 + $0x10] sm:$0xff]
        %v457 = vld [vmem:[%s384 + $0x18] sm:$0xff]
        %v458 = vpack.c.bf16 %v455, %v454
        %v459 = vpack.c.bf16 %v457, %v456
        %v460 = vld [vmem:[#allocation10] sm:$0xf]
        %v461 = vld [vmem:[#allocation10 + $0x4] sm:$0xf]
        %v462 = vld [vmem:[%s3] sm:$0x1]
        %v464 = vlaneseq
        %v465 = vshrl.u32 %v464, 7
        %v466 = vsub.s32 0, %v465
        %v467 = vrot.slane %v462, %v466
        %v471 = vunpack.c.l.b16 %v460
        %v472 = vunpack.c.l.b16 %v461
        %v473 = vpack.c.b16 %v472, %v471
        %vm475 = vcmask 130048
        %v477 = vsel %vm475, %v458, 0
        %v480 = vsel %vm475, %v459, 0
        %482 = vmatprep.subr.bf16.mxu0 0
        %483 = vmatpush1.bf16.msra.mxu0 %v473
        %484 = vmatprep.subr.bf16.mxu0 0
        %485 = vmatpush1.bf16.msra.mxu0 0
        %486 = vmatprep.subr.bf16.mxu0 0
        %487 = vmatpush1.bf16.msra.mxu0 0
        %488 = vmatprep.subr.bf16.mxu0 0
        %489 = vmatpush1.bf16.msra.mxu0 0
        %490 = vmatprep.subr.bf16.mxu0 0
        %491 = vmatpush1.bf16.msra.mxu0 0
        %492 = vmatprep.subr.bf16.mxu0 0
        %493 = vmatpush1.bf16.msra.mxu0 0
        %494 = vmatprep.subr.bf16.mxu0 0
        %495 = vmatpush1.bf16.msra.mxu0 0
        %496 = vmatprep.subr.bf16.mxu0 0
        %497 = vmatpush1.bf16.msra.mxu0 0
        %498 = vmatprep.subr.bf16.mxu0 0
        %499 = vmatpush1.bf16.msra.mxu0 0
        %500 = vmatprep.subr.bf16.mxu0 0
        %501 = vmatpush1.bf16.msra.mxu0 0
        %502 = vmatprep.subr.bf16.mxu0 0
        %503 = vmatpush1.bf16.msra.mxu0 0
        %504 = vmatprep.subr.bf16.mxu0 0
        %505 = vmatpush1.bf16.msra.mxu0 0
        %506 = vmatprep.subr.bf16.mxu0 0
        %507 = vmatpush1.bf16.msra.mxu0 0
        %508 = vmatprep.subr.bf16.mxu0 0
        %509 = vmatpush1.bf16.msra.mxu0 0
        %510 = vmatprep.subr.bf16.mxu0 0
        %511 = vmatpush1.bf16.msra.mxu0 0
        %512 = vmatprep.subr.bf16.mxu0 0
        %513 = vmatpush1.bf16.msra.mxu0 0
        %514 = vmatprep.mubr.bf16.mxu0 0
        %515 = vmatmul.mubr.bf16.gmra.mrb[0].mxu0 %v477
        %v516 = vpop.f32.mrb[0].mxu0
        %v517 = vadd.f32 %v467, %v516
        %v518 = vpop.f32.mrb[0].mxu0
        %v519 = vpop.f32.mrb[0].mxu0
        %v520 = vadd.f32 %v467, %v519
        %v521 = vpop.f32.mrb[0].mxu0
        %522 = vmatprep.mubr.bf16.mxu0 0
        %523 = vmatmul.mubr.bf16.gmra.mrb[0].mxu0 %v480
        %v524 = vpop.f32.mrb[0].mxu0
        %v525 = vadd.f32 %v467, %v524
        %v526 = vpop.f32.mrb[0].mxu0
        %v527 = vpop.f32.mrb[0].mxu0
        %v528 = vadd.f32 %v467, %v527
        %v529 = vpop.f32.mrb[0].mxu0
        %530 = vdwg.mxu0
        %531 = vst [vmem:[#allocation2] sm:$0xff] %v517
        %532 = vst [vmem:[#allocation2 + $0x8] sm:$0xff] %v520
        %533 = vst [vmem:[#allocation2 + $0x10] sm:$0xff] %v525
        %534 = vst [vmem:[#allocation2 + $0x18] sm:$0xff] %v528
        %p535 = scmp.eq.s32.totalorder %s32, 0
        // Predicated region
        $region77: #{tpu_custom_call.1} parent=59 // pred_check
          %p536 = pneg %p535
        $region78: #{tpu_custom_call.1} parent=59 // pred_check_branch
          %538 = sbr.rel (%p536) target = $region80
        $region79: #{tpu_custom_call.1} parent=59 // pred_region
          %vm539 = vcmask 261120
          %540 = vst.msk [vmem:[#allocation3] sm:$0xff] %vm539, 0.0
          %541 = vst.msk [vmem:[#allocation4] sm:$0xff] %vm539, 0.0
          %542 = vst.msk [vmem:[#allocation5] sm:$0xff] %vm539, 0.0
          %543 = vst.msk [vmem:[#allocation6] sm:$0xff] %vm539, 0.0
        $region80: #{tpu_custom_call.1} parent=59 // pred_fallthru
          _
        %v544 = vld [vmem:[#allocation3] sm:$0xff]
        %v545 = vld [vmem:[#allocation4] sm:$0xff]
        %v546 = vld [vmem:[#allocation5] sm:$0xff]
        %v547 = vld [vmem:[#allocation6] sm:$0xff]
        %v548 = vld [vmem:[#allocation2] sm:$0xff]
        %v549 = vpack.c.bf16 %v544, %v544
        %v554 = vunpack.c.l.b16 %v430
        %v555 = vunpack.c.l.b16 %v431
        %v556 = vunpack.c.l.b16 %v432
        %v557 = vunpack.c.l.b16 %v433
        %v558 = vpack.c.b16 %v555, %v554
        %v559 = vpack.c.b16 %v557, %v556
        %vm562 = vcmask 261120
        %v564 = vsel %vm562, %v549, 0
        %566 = vmatprep.subr.bf16.mxu0 0
        %567 = vmatpush1.bf16.msra.mxu0 %v558
        %568 = vmatprep.subr.bf16.mxu0 0
        %569 = vmatpush1.bf16.msra.mxu0 %v559
        %570 = vmatprep.subr.bf16.mxu0 0
        %571 = vmatpush1.bf16.msra.mxu0 0
        %572 = vmatprep.subr.bf16.mxu0 0
        %573 = vmatpush1.bf16.msra.mxu0 0
        %574 = vmatprep.subr.bf16.mxu0 0
        %575 = vmatpush1.bf16.msra.mxu0 0
        %576 = vmatprep.subr.bf16.mxu0 0
        %577 = vmatpush1.bf16.msra.mxu0 0
        %578 = vmatprep.subr.bf16.mxu0 0
        %579 = vmatpush1.bf16.msra.mxu0 0
        %580 = vmatprep.subr.bf16.mxu0 0
        %581 = vmatpush1.bf16.msra.mxu0 0
        %582 = vmatprep.subr.bf16.mxu0 0
        %583 = vmatpush1.bf16.msra.mxu0 0
        %584 = vmatprep.subr.bf16.mxu0 0
        %585 = vmatpush1.bf16.msra.mxu0 0
        %586 = vmatprep.subr.bf16.mxu0 0
        %587 = vmatpush1.bf16.msra.mxu0 0
        %588 = vmatprep.subr.bf16.mxu0 0
        %589 = vmatpush1.bf16.msra.mxu0 0
        %590 = vmatprep.subr.bf16.mxu0 0
        %591 = vmatpush1.bf16.msra.mxu0 0
        %592 = vmatprep.subr.bf16.mxu0 0
        %593 = vmatpush1.bf16.msra.mxu0 0
        %594 = vmatprep.subr.bf16.mxu0 0
        %595 = vmatpush1.bf16.msra.mxu0 0
        %596 = vmatprep.subr.bf16.mxu0 0
        %597 = vmatpush1.bf16.msra.mxu0 0
        %598 = vmatprep.mubr.bf16.mxu0 0
        %599 = vmatmul.mubr.bf16.gmra.mrb[0].mxu0 %v564
        %v600 = vpop.f32.mrb[0].mxu0
        %v601 = vadd.f32 0.0, %v600
        %v602 = vpop.f32.mrb[0].mxu0
        %v603 = vpop.f32.mrb[0].mxu0
        %v604 = vpop.f32.mrb[0].mxu0
        %605 = vdwg.mxu0
        %v606 = vadd.f32 %v548, %v601
        %v607 = vmul.f32 %v606, 0.5
        %v608 = vsel %vm453, %v606, %v607
        %v609 = vtanh.pop %v608
        %v610 = vmul.f32 %v609, 0.5
        %v611 = vadd.f32 %v610, 0.5
        %v612 = vsel %vm453, %v609, %v611
        %614 = vrot.lane.b32.xlu0 %v545, 32
        %v615 = vpop.permute.xlu0 %614
        %v617 = vmul.f32 %v612, %v615
        %619 = vrot.lane.b32.xlu0 %v612, 64
        %v620 = vpop.permute.xlu0 %619
        %v622 = vmul.f32 %v612, %v620
        %624 = vrot.lane.b32.xlu0 %v622, 32
        %v625 = vpop.permute.xlu0 %624
        %v627 = vadd.f32 %v617, %v625
        %v628 = vtanh.pop %v627
        %630 = vrot.lane.b32.xlu0 %v628, 64
        %v631 = vpop.permute.xlu0 %630
        %v633 = vmul.f32 %v612, %v631
        %635 = vrot.lane.b32.xlu0 %v633, 32
        %v636 = vpop.permute.xlu0 %635
        %639 = vrot.lane.b32.xlu0 %v546, 32
        %v640 = vpop.permute.xlu0 %639
        %v642 = vsel %vm562, %v636, %v640
        %v643 = vpack.c.bf16 %v642, %v642
        %v652 = vunpack.c.l.b16 %v434
        %v653 = vunpack.c.l.b16 %v435
        %v654 = vunpack.c.l.b16 %v436
        %v655 = vunpack.c.l.b16 %v437
        %v656 = vunpack.c.l.b16 %v438
        %v657 = vunpack.c.l.b16 %v439
        %v658 = vunpack.c.l.b16 %v440
        %v659 = vunpack.c.l.b16 %v441
        %v660 = vpack.c.b16 %v653, %v652
        %v661 = vpack.c.b16 %v655, %v654
        %v662 = vpack.c.b16 %v657, %v656
        %v663 = vpack.c.b16 %v659, %v658
        %vm668 = vcmask 523264
        %v670 = vsel %vm668, %v643, 0
        %672 = vmatprep.subr.bf16.mxu0 0
        %673 = vmatpush1.bf16.msra.mxu0 %v660
        %674 = vmatprep.subr.bf16.mxu0 0
        %675 = vmatpush1.bf16.msra.mxu0 %v661
        %676 = vmatprep.subr.bf16.mxu0 0
        %677 = vmatpush1.bf16.msra.mxu0 %v662
        %678 = vmatprep.subr.bf16.mxu0 0
        %679 = vmatpush1.bf16.msra.mxu0 %v663
        %680 = vmatprep.subr.bf16.mxu0 0
        %681 = vmatpush1.bf16.msra.mxu0 0
        %682 = vmatprep.subr.bf16.mxu0 0
        %683 = vmatpush1.bf16.msra.mxu0 0
        %684 = vmatprep.subr.bf16.mxu0 0
        %685 = vmatpush1.bf16.msra.mxu0 0
        %686 = vmatprep.subr.bf16.mxu0 0
        %687 = vmatpush1.bf16.msra.mxu0 0
        %688 = vmatprep.subr.bf16.mxu0 0
        %689 = vmatpush1.bf16.msra.mxu0 0
        %690 = vmatprep.subr.bf16.mxu0 0
        %691 = vmatpush1.bf16.msra.mxu0 0
        %692 = vmatprep.subr.bf16.mxu0 0
        %693 = vmatpush1.bf16.msra.mxu0 0
        %694 = vmatprep.subr.bf16.mxu0 0
        %695 = vmatpush1.bf16.msra.mxu0 0
        %696 = vmatprep.subr.bf16.mxu0 0
        %697 = vmatpush1.bf16.msra.mxu0 0
        %698 = vmatprep.subr.bf16.mxu0 0
        %699 = vmatpush1.bf16.msra.mxu0 0
        %700 = vmatprep.subr.bf16.mxu0 0
        %701 = vmatpush1.bf16.msra.mxu0 0
        %702 = vmatprep.subr.bf16.mxu0 0
        %703 = vmatpush1.bf16.msra.mxu0 0
        %704 = vmatprep.mubr.bf16.mxu0 0
        %705 = vmatmul.mubr.bf16.gmra.mrb[0].mxu0 %v670
        %v706 = vpop.f32.mrb[0].mxu0
        %v707 = vadd.f32 %v447, %v706
        %v708 = vpop.f32.mrb[0].mxu0
        %v709 = vpop.f32.mrb[0].mxu0
        %v710 = vpop.f32.mrb[0].mxu0
        %711 = vdwg.mxu0
        %v712 = vmul.f32 %v707, 0.5
        %v713 = vsel %vm453, %v707, %v712
        %v714 = vtanh.pop %v713
        %v715 = vmul.f32 %v714, 0.5
        %v716 = vadd.f32 %v715, 0.5
        %v717 = vsel %vm453, %v714, %v716
        %719 = vrot.lane.b32.xlu0 %v547, 32
        %v720 = vpop.permute.xlu0 %719
        %v722 = vmul.f32 %v717, %v720
        %724 = vrot.lane.b32.xlu0 %v717, 64
        %v725 = vpop.permute.xlu0 %724
        %v727 = vmul.f32 %v717, %v725
        %729 = vrot.lane.b32.xlu0 %v727, 32
        %v730 = vpop.permute.xlu0 %729
        %v732 = vadd.f32 %v722, %v730
        %v733 = vtanh.pop %v732
        %735 = vrot.lane.b32.xlu0 %v733, 64
        %v736 = vpop.permute.xlu0 %735
        %v738 = vmul.f32 %v717, %v736
        %s739 = scalar_lea.vmem [#allocation2], 8
        %v740 = vld [vmem:[%s739] sm:$0xff]
        %v741 = vpack.c.bf16 %v633, %v633
        %743 = vrot.lane.b32.xlu0 %v741, 32
        %v744 = vpop.permute.xlu0 %743
        %v746 = vsel %vm562, %v744, 0
        %748 = vmatprep.subr.bf16.mxu0 0
        %749 = vmatpush1.bf16.msra.mxu0 %v558
        %750 = vmatprep.subr.bf16.mxu0 0
        %751 = vmatpush1.bf16.msra.mxu0 %v559
        %752 = vmatprep.subr.bf16.mxu0 0
        %753 = vmatpush1.bf16.msra.mxu0 0
        %754 = vmatprep.subr.bf16.mxu0 0
        %755 = vmatpush1.bf16.msra.mxu0 0
        %756 = vmatprep.subr.bf16.mxu0 0
        %757 = vmatpush1.bf16.msra.mxu0 0
        %758 = vmatprep.subr.bf16.mxu0 0
        %759 = vmatpush1.bf16.msra.mxu0 0
        %760 = vmatprep.subr.bf16.mxu0 0
        %761 = vmatpush1.bf16.msra.mxu0 0
        %762 = vmatprep.subr.bf16.mxu0 0
        %763 = vmatpush1.bf16.msra.mxu0 0
        %764 = vmatprep.subr.bf16.mxu0 0
        %765 = vmatpush1.bf16.msra.mxu0 0
        %766 = vmatprep.subr.bf16.mxu0 0
        %767 = vmatpush1.bf16.msra.mxu0 0
        %768 = vmatprep.subr.bf16.mxu0 0
        %769 = vmatpush1.bf16.msra.mxu0 0
        %770 = vmatprep.subr.bf16.mxu0 0
        %771 = vmatpush1.bf16.msra.mxu0 0
        %772 = vmatprep.subr.bf16.mxu0 0
        %773 = vmatpush1.bf16.msra.mxu0 0
        %774 = vmatprep.subr.bf16.mxu0 0
        %775 = vmatpush1.bf16.msra.mxu0 0
        %776 = vmatprep.subr.bf16.mxu0 0
        %777 = vmatpush1.bf16.msra.mxu0 0
        %778 = vmatprep.subr.bf16.mxu0 0
        %779 = vmatpush1.bf16.msra.mxu0 0
        %780 = vmatprep.mubr.bf16.mxu0 0
        %781 = vmatmul.mubr.bf16.gmra.mrb[0].mxu0 %v746
        %v782 = vpop.f32.mrb[0].mxu0
        %v783 = vadd.f32 0.0, %v782
        %v784 = vpop.f32.mrb[0].mxu0
        %v785 = vpop.f32.mrb[0].mxu0
        %v786 = vpop.f32.mrb[0].mxu0
        %787 = vdwg.mxu0
        %v788 = vadd.f32 %v740, %v783
        %v789 = vmul.f32 %v788, 0.5
        %v790 = vsel %vm453, %v788, %v789
        %v791 = vtanh.pop %v790
        %v792 = vmul.f32 %v791, 0.5
        %v793 = vadd.f32 %v792, 0.5
        %v794 = vsel %vm453, %v791, %v793
        %v795 = vmul.f32 %v794, %v627
        %797 = vrot.lane.b32.xlu0 %v794, 64
        %v798 = vpop.permute.xlu0 %797
        %v800 = vmul.f32 %v794, %v798
        %802 = vrot.lane.b32.xlu0 %v800, 32
        %v803 = vpop.permute.xlu0 %802
        %v805 = vadd.f32 %v795, %v803
        %v806 = vtanh.pop %v805
        %808 = vrot.lane.b32.xlu0 %v806, 64
        %v809 = vpop.permute.xlu0 %808
        %v811 = vmul.f32 %v794, %v809
        %813 = vrot.lane.b32.xlu0 %v811, 32
        %v814 = vpop.permute.xlu0 %813
        %817 = vrot.lane.b32.xlu0 %v738, 64
        %v818 = vpop.permute.xlu0 %817
        %v820 = vsel %vm562, %v814, %v818
        %v821 = vpack.c.bf16 %v820, %v820
        %v823 = vsel %vm668, %v821, 0
        %825 = vmatprep.subr.bf16.mxu0 0
        %826 = vmatpush1.bf16.msra.mxu0 %v660
        %827 = vmatprep.subr.bf16.mxu0 0
        %828 = vmatpush1.bf16.msra.mxu0 %v661
        %829 = vmatprep.subr.bf16.mxu0 0
        %830 = vmatpush1.bf16.msra.mxu0 %v662
        %831 = vmatprep.subr.bf16.mxu0 0
        %832 = vmatpush1.bf16.msra.mxu0 %v663
        %833 = vmatprep.subr.bf16.mxu0 0
        %834 = vmatpush1.bf16.msra.mxu0 0
        %835 = vmatprep.subr.bf16.mxu0 0
        %836 = vmatpush1.bf16.msra.mxu0 0
        %837 = vmatprep.subr.bf16.mxu0 0
        %838 = vmatpush1.bf16.msra.mxu0 0
        %839 = vmatprep.subr.bf16.mxu0 0
        %840 = vmatpush1.bf16.msra.mxu0 0
        %841 = vmatprep.subr.bf16.mxu0 0
        %842 = vmatpush1.bf16.msra.mxu0 0
        %843 = vmatprep.subr.bf16.mxu0 0
        %844 = vmatpush1.bf16.msra.mxu0 0
        %845 = vmatprep.subr.bf16.mxu0 0
        %846 = vmatpush1.bf16.msra.mxu0 0
        %847 = vmatprep.subr.bf16.mxu0 0
        %848 = vmatpush1.bf16.msra.mxu0 0
        %849 = vmatprep.subr.bf16.mxu0 0
        %850 = vmatpush1.bf16.msra.mxu0 0
        %851 = vmatprep.subr.bf16.mxu0 0
        %852 = vmatpush1.bf16.msra.mxu0 0
        %853 = vmatprep.subr.bf16.mxu0 0
        %854 = vmatpush1.bf16.msra.mxu0 0
        %855 = vmatprep.subr.bf16.mxu0 0
        %856 = vmatpush1.bf16.msra.mxu0 0
        %857 = vmatprep.mubr.bf16.mxu0 0
        %858 = vmatmul.mubr.bf16.gmra.mrb[0].mxu0 %v823
        %v859 = vpop.f32.mrb[0].mxu0
        %v860 = vadd.f32 %v447, %v859
        %v861 = vpop.f32.mrb[0].mxu0
        %v862 = vpop.f32.mrb[0].mxu0
        %v863 = vpop.f32.mrb[0].mxu0
        %864 = vdwg.mxu0
        %v865 = vmul.f32 %v860, 0.5
        %v866 = vsel %vm453, %v860, %v865
        %v867 = vtanh.pop %v866
        %v868 = vmul.f32 %v867, 0.5
        %v869 = vadd.f32 %v868, 0.5
        %v870 = vsel %vm453, %v867, %v869
        %v871 = vmul.f32 %v870, %v732
        %873 = vrot.lane.b32.xlu0 %v870, 64
        %v874 = vpop.permute.xlu0 %873
        %v876 = vmul.f32 %v870, %v874
        %878 = vrot.lane.b32.xlu0 %v876, 32
        %v879 = vpop.permute.xlu0 %878
        %v881 = vadd.f32 %v871, %v879
        %v882 = vtanh.pop %v881
        %884 = vrot.lane.b32.xlu0 %v882, 64
        %v885 = vpop.permute.xlu0 %884
        %v887 = vmul.f32 %v870, %v885
        %s888 = scalar_lea.vmem [#allocation2], 16
        %v889 = vld [vmem:[%s888] sm:$0xff]
        %v890 = vpack.c.bf16 %v811, %v811
        %892 = vrot.lane.b32.xlu0 %v890, 32
        %v893 = vpop.permute.xlu0 %892
        %v895 = vsel %vm562, %v893, 0
        %897 = vmatprep.subr.bf16.mxu0 0
        %898 = vmatpush1.bf16.msra.mxu0 %v558
        %899 = vmatprep.subr.bf16.mxu0 0
        %900 = vmatpush1.bf16.msra.mxu0 %v559
        %901 = vmatprep.subr.bf16.mxu0 0
        %902 = vmatpush1.bf16.msra.mxu0 0
        %903 = vmatprep.subr.bf16.mxu0 0
        %904 = vmatpush1.bf16.msra.mxu0 0
        %905 = vmatprep.subr.bf16.mxu0 0
        %906 = vmatpush1.bf16.msra.mxu0 0
        %907 = vmatprep.subr.bf16.mxu0 0
        %908 = vmatpush1.bf16.msra.mxu0 0
        %909 = vmatprep.subr.bf16.mxu0 0
        %910 = vmatpush1.bf16.msra.mxu0 0
        %911 = vmatprep.subr.bf16.mxu0 0
        %912 = vmatpush1.bf16.msra.mxu0 0
        %913 = vmatprep.subr.bf16.mxu0 0
        %914 = vmatpush1.bf16.msra.mxu0 0
        %915 = vmatprep.subr.bf16.mxu0 0
        %916 = vmatpush1.bf16.msra.mxu0 0
        %917 = vmatprep.subr.bf16.mxu0 0
        %918 = vmatpush1.bf16.msra.mxu0 0
        %919 = vmatprep.subr.bf16.mxu0 0
        %920 = vmatpush1.bf16.msra.mxu0 0
        %921 = vmatprep.subr.bf16.mxu0 0
        %922 = vmatpush1.bf16.msra.mxu0 0
        %923 = vmatprep.subr.bf16.mxu0 0
        %924 = vmatpush1.bf16.msra.mxu0 0
        %925 = vmatprep.subr.bf16.mxu0 0
        %926 = vmatpush1.bf16.msra.mxu0 0
        %927 = vmatprep.subr.bf16.mxu0 0
        %928 = vmatpush1.bf16.msra.mxu0 0
        %929 = vmatprep.mubr.bf16.mxu0 0
        %930 = vmatmul.mubr.bf16.gmra.mrb[0].mxu0 %v895
        %v931 = vpop.f32.mrb[0].mxu0
        %v932 = vadd.f32 0.0, %v931
        %v933 = vpop.f32.mrb[0].mxu0
        %v934 = vpop.f32.mrb[0].mxu0
        %v935 = vpop.f32.mrb[0].mxu0
        %936 = vdwg.mxu0
        %v937 = vadd.f32 %v889, %v932
        %v938 = vmul.f32 %v937, 0.5
        %v939 = vsel %vm453, %v937, %v938
        %v940 = vtanh.pop %v939
        %v941 = vmul.f32 %v940, 0.5
        %v942 = vadd.f32 %v941, 0.5
        %v943 = vsel %vm453, %v940, %v942
        %v944 = vmul.f32 %v943, %v805
        %946 = vrot.lane.b32.xlu0 %v943, 64
        %v947 = vpop.permute.xlu0 %946
        %v949 = vmul.f32 %v943, %v947
        %951 = vrot.lane.b32.xlu0 %v949, 32
        %v952 = vpop.permute.xlu0 %951
        %v954 = vadd.f32 %v944, %v952
        %v955 = vtanh.pop %v954
        %957 = vrot.lane.b32.xlu0 %v955, 64
        %v958 = vpop.permute.xlu0 %957
        %v960 = vmul.f32 %v943, %v958
        %962 = vrot.lane.b32.xlu0 %v960, 32
        %v963 = vpop.permute.xlu0 %962
        %966 = vrot.lane.b32.xlu0 %v887, 64
        %v967 = vpop.permute.xlu0 %966
        %v969 = vsel %vm562, %v963, %v967
        %v970 = vpack.c.bf16 %v969, %v969
        %v972 = vsel %vm668, %v970, 0
        %974 = vmatprep.subr.bf16.mxu0 0
        %975 = vmatpush1.bf16.msra.mxu0 %v660
        %976 = vmatprep.subr.bf16.mxu0 0
        %977 = vmatpush1.bf16.msra.mxu0 %v661
        %978 = vmatprep.subr.bf16.mxu0 0
        %979 = vmatpush1.bf16.msra.mxu0 %v662
        %980 = vmatprep.subr.bf16.mxu0 0
        %981 = vmatpush1.bf16.msra.mxu0 %v663
        %982 = vmatprep.subr.bf16.mxu0 0
        %983 = vmatpush1.bf16.msra.mxu0 0
        %984 = vmatprep.subr.bf16.mxu0 0
        %985 = vmatpush1.bf16.msra.mxu0 0
        %986 = vmatprep.subr.bf16.mxu0 0
        %987 = vmatpush1.bf16.msra.mxu0 0
        %988 = vmatprep.subr.bf16.mxu0 0
        %989 = vmatpush1.bf16.msra.mxu0 0
        %990 = vmatprep.subr.bf16.mxu0 0
        %991 = vmatpush1.bf16.msra.mxu0 0
        %992 = vmatprep.subr.bf16.mxu0 0
        %993 = vmatpush1.bf16.msra.mxu0 0
        %994 = vmatprep.subr.bf16.mxu0 0
        %995 = vmatpush1.bf16.msra.mxu0 0
        %996 = vmatprep.subr.bf16.mxu0 0
        %997 = vmatpush1.bf16.msra.mxu0 0
        %998 = vmatprep.subr.bf16.mxu0 0
        %999 = vmatpush1.bf16.msra.mxu0 0
        %1000 = vmatprep.subr.bf16.mxu0 0
        %1001 = vmatpush1.bf16.msra.mxu0 0
        %1002 = vmatprep.subr.bf16.mxu0 0
        %1003 = vmatpush1.bf16.msra.mxu0 0
        %1004 = vmatprep.subr.bf16.mxu0 0
        %1005 = vmatpush1.bf16.msra.mxu0 0
        %1006 = vmatprep.mubr.bf16.mxu0 0
        %1007 = vmatmul.mubr.bf16.gmra.mrb[0].mxu0 %v972
        %v1008 = vpop.f32.mrb[0].mxu0
        %v1009 = vadd.f32 %v447, %v1008
        %v1010 = vpop.f32.mrb[0].mxu0
        %v1011 = vpop.f32.mrb[0].mxu0
        %v1012 = vpop.f32.mrb[0].mxu0
        %1013 = vdwg.mxu0
        %v1014 = vmul.f32 %v1009, 0.5
        %v1015 = vsel %vm453, %v1009, %v1014
        %v1016 = vtanh.pop %v1015
        %v1017 = vmul.f32 %v1016, 0.5
        %v1018 = vadd.f32 %v1017, 0.5
        %v1019 = vsel %vm453, %v1016, %v1018
        %v1020 = vmul.f32 %v1019, %v881
        %1022 = vrot.lane.b32.xlu0 %v1019, 64
        %v1023 = vpop.permute.xlu0 %1022
        %v1025 = vmul.f32 %v1019, %v1023
        %1027 = vrot.lane.b32.xlu0 %v1025, 32
        %v1028 = vpop.permute.xlu0 %1027
        %v1030 = vadd.f32 %v1020, %v1028
        %v1031 = vtanh.pop %v1030
        %1033 = vrot.lane.b32.xlu0 %v1031, 64
        %v1034 = vpop.permute.xlu0 %1033
        %v1036 = vmul.f32 %v1019, %v1034
        %s1037 = scalar_lea.vmem [#allocation2], 24
        %v1038 = vld [vmem:[%s1037] sm:$0xff]
        %v1039 = vpack.c.bf16 %v960, %v960
        %1041 = vrot.lane.b32.xlu0 %v1039, 32
        %v1042 = vpop.permute.xlu0 %1041
        %v1044 = vsel %vm562, %v1042, 0
        %1046 = vmatprep.subr.bf16.mxu0 0
        %1047 = vmatpush1.bf16.msra.mxu0 %v558
        %1048 = vmatprep.subr.bf16.mxu0 0
        %1049 = vmatpush1.bf16.msra.mxu0 %v559
        %1050 = vmatprep.subr.bf16.mxu0 0
        %1051 = vmatpush1.bf16.msra.mxu0 0
        %1052 = vmatprep.subr.bf16.mxu0 0
        %1053 = vmatpush1.bf16.msra.mxu0 0
        %1054 = vmatprep.subr.bf16.mxu0 0
        %1055 = vmatpush1.bf16.msra.mxu0 0
        %1056 = vmatprep.subr.bf16.mxu0 0
        %1057 = vmatpush1.bf16.msra.mxu0 0
        %1058 = vmatprep.subr.bf16.mxu0 0
        %1059 = vmatpush1.bf16.msra.mxu0 0
        %1060 = vmatprep.subr.bf16.mxu0 0
        %1061 = vmatpush1.bf16.msra.mxu0 0
        %1062 = vmatprep.subr.bf16.mxu0 0
        %1063 = vmatpush1.bf16.msra.mxu0 0
        %1064 = vmatprep.subr.bf16.mxu0 0
        %1065 = vmatpush1.bf16.msra.mxu0 0
        %1066 = vmatprep.subr.bf16.mxu0 0
        %1067 = vmatpush1.bf16.msra.mxu0 0
        %1068 = vmatprep.subr.bf16.mxu0 0
        %1069 = vmatpush1.bf16.msra.mxu0 0
        %1070 = vmatprep.subr.bf16.mxu0 0
        %1071 = vmatpush1.bf16.msra.mxu0 0
        %1072 = vmatprep.subr.bf16.mxu0 0
        %1073 = vmatpush1.bf16.msra.mxu0 0
        %1074 = vmatprep.subr.bf16.mxu0 0
        %1075 = vmatpush1.bf16.msra.mxu0 0
        %1076 = vmatprep.subr.bf16.mxu0 0
        %1077 = vmatpush1.bf16.msra.mxu0 0
        %1078 = vmatprep.mubr.bf16.mxu0 0
        %1079 = vmatmul.mubr.bf16.gmra.mrb[0].mxu0 %v1044
        %v1080 = vpop.f32.mrb[0].mxu0
        %v1081 = vadd.f32 0.0, %v1080
        %v1082 = vpop.f32.mrb[0].mxu0
        %v1083 = vpop.f32.mrb[0].mxu0
        %v1084 = vpop.f32.mrb[0].mxu0
        %1085 = vdwg.mxu0
        %v1086 = vadd.f32 %v1038, %v1081
        %v1087 = vmul.f32 %v1086, 0.5
        %v1088 = vsel %vm453, %v1086, %v1087
        %v1089 = vtanh.pop %v1088
        %v1090 = vmul.f32 %v1089, 0.5
        %v1091 = vadd.f32 %v1090, 0.5
        %v1092 = vsel %vm453, %v1089, %v1091
        %v1093 = vmul.f32 %v1092, %v954
        %1095 = vrot.lane.b32.xlu0 %v1092, 64
        %v1096 = vpop.permute.xlu0 %1095
        %v1098 = vmul.f32 %v1092, %v1096
        %1100 = vrot.lane.b32.xlu0 %v1098, 32
        %v1101 = vpop.permute.xlu0 %1100
        %v1103 = vadd.f32 %v1093, %v1101
        %v1104 = vtanh.pop %v1103
        %1106 = vrot.lane.b32.xlu0 %v1104, 64
        %v1107 = vpop.permute.xlu0 %1106
        %v1109 = vmul.f32 %v1092, %v1107
        %1111 = vrot.lane.b32.xlu0 %v1109, 32
        %v1112 = vpop.permute.xlu0 %1111
        %1115 = vrot.lane.b32.xlu0 %v1036, 64
        %v1116 = vpop.permute.xlu0 %1115
        %v1118 = vsel %vm562, %v1112, %v1116
        %v1119 = vpack.c.bf16 %v1118, %v1118
        %v1121 = vsel %vm668, %v1119, 0
        %1123 = vmatprep.subr.bf16.mxu0 0
        %1124 = vmatpush1.bf16.msra.mxu0 %v660
        %1125 = vmatprep.subr.bf16.mxu0 0
        %1126 = vmatpush1.bf16.msra.mxu0 %v661
        %1127 = vmatprep.subr.bf16.mxu0 0
        %1128 = vmatpush1.bf16.msra.mxu0 %v662
        %1129 = vmatprep.subr.bf16.mxu0 0
        %1130 = vmatpush1.bf16.msra.mxu0 %v663
        %1131 = vmatprep.subr.bf16.mxu0 0
        %1132 = vmatpush1.bf16.msra.mxu0 0
        %1133 = vmatprep.subr.bf16.mxu0 0
        %1134 = vmatpush1.bf16.msra.mxu0 0
        %1135 = vmatprep.subr.bf16.mxu0 0
        %1136 = vmatpush1.bf16.msra.mxu0 0
        %1137 = vmatprep.subr.bf16.mxu0 0
        %1138 = vmatpush1.bf16.msra.mxu0 0
        %1139 = vmatprep.subr.bf16.mxu0 0
        %1140 = vmatpush1.bf16.msra.mxu0 0
        %1141 = vmatprep.subr.bf16.mxu0 0
        %1142 = vmatpush1.bf16.msra.mxu0 0
        %1143 = vmatprep.subr.bf16.mxu0 0
        %1144 = vmatpush1.bf16.msra.mxu0 0
        %1145 = vmatprep.subr.bf16.mxu0 0
        %1146 = vmatpush1.bf16.msra.mxu0 0
        %1147 = vmatprep.subr.bf16.mxu0 0
        %1148 = vmatpush1.bf16.msra.mxu0 0
        %1149 = vmatprep.subr.bf16.mxu0 0
        %1150 = vmatpush1.bf16.msra.mxu0 0
        %1151 = vmatprep.subr.bf16.mxu0 0
        %1152 = vmatpush1.bf16.msra.mxu0 0
        %1153 = vmatprep.subr.bf16.mxu0 0
        %1154 = vmatpush1.bf16.msra.mxu0 0
        %1155 = vmatprep.mubr.bf16.mxu0 0
        %1156 = vmatmul.mubr.bf16.gmra.mrb[0].mxu0 %v1121
        %v1157 = vpop.f32.mrb[0].mxu0
        %v1158 = vadd.f32 %v447, %v1157
        %v1159 = vpop.f32.mrb[0].mxu0
        %v1160 = vpop.f32.mrb[0].mxu0
        %v1161 = vpop.f32.mrb[0].mxu0
        %1162 = vdwg.mxu0
        %v1163 = vmul.f32 %v1158, 0.5
        %v1164 = vsel %vm453, %v1158, %v1163
        %v1165 = vtanh.pop %v1164
        %v1166 = vmul.f32 %v1165, 0.5
        %v1167 = vadd.f32 %v1166, 0.5
        %v1168 = vsel %vm453, %v1165, %v1167
        %v1169 = vmul.f32 %v1168, %v1030
        %1171 = vrot.lane.b32.xlu0 %v1168, 64
        %v1172 = vpop.permute.xlu0 %1171
        %v1174 = vmul.f32 %v1168, %v1172
        %1176 = vrot.lane.b32.xlu0 %v1174, 32
        %v1177 = vpop.permute.xlu0 %1176
        %v1179 = vadd.f32 %v1169, %v1177
        %v1180 = vtanh.pop %v1179
        %1182 = vrot.lane.b32.xlu0 %v1180, 64
        %v1183 = vpop.permute.xlu0 %1182
        %v1185 = vmul.f32 %v1168, %v1183
        %1186 = vst.msk [vmem:[#allocation3] sm:$0xff] %vm562, %v1112
        %1188 = vrot.lane.b32.xlu0 %v1103, 96
        %v1189 = vpop.permute.xlu0 %1188
        %1191 = vst.msk [vmem:[#allocation4] sm:$0xff] %vm562, %v1189
        %1193 = vrot.lane.b32.xlu0 %v1185, 32
        %v1194 = vpop.permute.xlu0 %1193
        %1196 = vst.msk [vmem:[#allocation5] sm:$0xff] %vm562, %v1194
        %1198 = vrot.lane.b32.xlu0 %v1179, 96
        %v1199 = vpop.permute.xlu0 %1198
        %1201 = vst.msk [vmem:[#allocation6] sm:$0xff] %vm562, %v1199
        %p1202 = scmp.eq.s32.totalorder %s32, 1
        // Predicated region
        $region81: #{tpu_custom_call.1} parent=59 // pred_check
          %p1203 = pneg %p1202
        $region82: #{tpu_custom_call.1} parent=59 // pred_check_branch
          %1205 = sbr.rel (%p1203) target = $region84
        $region83: #{tpu_custom_call.1} parent=59 // pred_region
          %v1206 = vpack.c.bf16 %v1185, %v1185
          %v1207 = vld [vmem:[%s6] sm:$0xf]
          %v1208 = vld [vmem:[%s6 + $0x4] sm:$0xf]
          %v1209 = vld [vmem:[%s6 + $0x8] sm:$0xf]
          %v1210 = vld [vmem:[%s6 + $0xc] sm:$0xf]
          %v1211 = vld [vmem:[#allocation13] sm:$0x1]
          %v1213 = vlaneseq
          %v1214 = vshrl.u32 %v1213, 7
          %v1215 = vsub.s32 0, %v1214
          %v1216 = vrot.slane %v1211, %v1215
          %1219 = vrot.lane.b32.xlu0 %v1206, 32
          %v1220 = vpop.permute.xlu0 %1219
          %v1225 = vunpack.c.l.b16 %v1207
          %v1226 = vunpack.c.l.b16 %v1208
          %v1227 = vunpack.c.l.b16 %v1209
          %v1228 = vunpack.c.l.b16 %v1210
          %v1229 = vpack.c.b16 %v1226, %v1225
          %v1230 = vpack.c.b16 %v1228, %v1227
          %v1234 = vsel %vm562, %v1220, 0
          %1236 = vmatprep.subr.bf16.mxu0 0
          %1237 = vmatpush1.bf16.msra.mxu0 %v1229
          %1238 = vmatprep.subr.bf16.mxu0 0
          %1239 = vmatpush1.bf16.msra.mxu0 %v1230
          %1240 = vmatprep.subr.bf16.mxu0 0
          %1241 = vmatpush1.bf16.msra.mxu0 0
          %1242 = vmatprep.subr.bf16.mxu0 0
          %1243 = vmatpush1.bf16.msra.mxu0 0
          %1244 = vmatprep.subr.bf16.mxu0 0
          %1245 = vmatpush1.bf16.msra.mxu0 0
          %1246 = vmatprep.subr.bf16.mxu0 0
          %1247 = vmatpush1.bf16.msra.mxu0 0
          %1248 = vmatprep.subr.bf16.mxu0 0
          %1249 = vmatpush1.bf16.msra.mxu0 0
          %1250 = vmatprep.subr.bf16.mxu0 0
          %1251 = vmatpush1.bf16.msra.mxu0 0
          %1252 = vmatprep.subr.bf16.mxu0 0
          %1253 = vmatpush1.bf16.msra.mxu0 0
          %1254 = vmatprep.subr.bf16.mxu0 0
          %1255 = vmatpush1.bf16.msra.mxu0 0
          %1256 = vmatprep.subr.bf16.mxu0 0
          %1257 = vmatpush1.bf16.msra.mxu0 0
          %1258 = vmatprep.subr.bf16.mxu0 0
          %1259 = vmatpush1.bf16.msra.mxu0 0
          %1260 = vmatprep.subr.bf16.mxu0 0
          %1261 = vmatpush1.bf16.msra.mxu0 0
          %1262 = vmatprep.subr.bf16.mxu0 0
          %1263 = vmatpush1.bf16.msra.mxu0 0
          %1264 = vmatprep.subr.bf16.mxu0 0
          %1265 = vmatpush1.bf16.msra.mxu0 0
          %1266 = vmatprep.subr.bf16.mxu0 0
          %1267 = vmatpush1.bf16.msra.mxu0 0
          %1268 = vmatprep.mubr.bf16.mxu0 0
          %1269 = vmatmul.mubr.bf16.gmra.mrb[0].mxu0 %v1234
          %v1270 = vpop.f32.mrb[0].mxu0
          %v1271 = vadd.f32 %v1216, %v1270
          %v1272 = vpop.f32.mrb[0].mxu0
          %v1273 = vpop.f32.mrb[0].mxu0
          %v1274 = vpop.f32.mrb[0].mxu0
          %1275 = vdwg.mxu0
          %v1276 = vpack.c.bf16 %v1271, %v1271
          %v1277 = vld [vmem:[%s8] sm:$0xf]
          %v1278 = vld [vmem:[%s8 + $0x4] sm:$0xf]
          %v1279 = vld [vmem:[%s9] sm:$0x1]
          %v1281 = vlaneseq
          %v1282 = vshrl.u32 %v1281, 7
          %v1283 = vsub.s32 0, %v1282
          %v1284 = vrot.slane %v1279, %v1283
          %v1288 = vunpack.c.l.b16 %v1277
          %v1289 = vunpack.c.l.b16 %v1278
          %v1290 = vpack.c.b16 %v1289, %v1288
          %v1293 = vsel %vm475, %v1276, 0
          %1295 = vmatprep.subr.bf16.mxu0 0
          %1296 = vmatpush1.bf16.msra.mxu0 %v1290
          %1297 = vmatprep.subr.bf16.mxu0 0
          %1298 = vmatpush1.bf16.msra.mxu0 0
          %1299 = vmatprep.subr.bf16.mxu0 0
          %1300 = vmatpush1.bf16.msra.mxu0 0
          %1301 = vmatprep.subr.bf16.mxu0 0
          %1302 = vmatpush1.bf16.msra.mxu0 0
          %1303 = vmatprep.subr.bf16.mxu0 0
          %1304 = vmatpush1.bf16.msra.mxu0 0
          %1305 = vmatprep.subr.bf16.mxu0 0
          %1306 = vmatpush1.bf16.msra.mxu0 0
          %1307 = vmatprep.subr.bf16.mxu0 0
          %1308 = vmatpush1.bf16.msra.mxu0 0
          %1309 = vmatprep.subr.bf16.mxu0 0
          %1310 = vmatpush1.bf16.msra.mxu0 0
          %1311 = vmatprep.subr.bf16.mxu0 0
          %1312 = vmatpush1.bf16.msra.mxu0 0
          %1313 = vmatprep.subr.bf16.mxu0 0
          %1314 = vmatpush1.bf16.msra.mxu0 0
          %1315 = vmatprep.subr.bf16.mxu0 0
          %1316 = vmatpush1.bf16.msra.mxu0 0
          %1317 = vmatprep.subr.bf16.mxu0 0
          %1318 = vmatpush1.bf16.msra.mxu0 0
          %1319 = vmatprep.subr.bf16.mxu0 0
          %1320 = vmatpush1.bf16.msra.mxu0 0
          %1321 = vmatprep.subr.bf16.mxu0 0
          %1322 = vmatpush1.bf16.msra.mxu0 0
          %1323 = vmatprep.subr.bf16.mxu0 0
          %1324 = vmatpush1.bf16.msra.mxu0 0
          %1325 = vmatprep.subr.bf16.mxu0 0
          %1326 = vmatpush1.bf16.msra.mxu0 0
          %1327 = vmatprep.mubr.bf16.mxu0 0
          %1328 = vmatmul.mubr.bf16.gmra.mrb[0].mxu0 %v1293
          %v1329 = vpop.f32.mrb[0].mxu0
          %v1330 = vadd.f32 %v1284, %v1329
          %v1331 = vpop.f32.mrb[0].mxu0
          %v1332 = vpop.f32.mrb[0].mxu0
          %v1333 = vpop.f32.mrb[0].mxu0
          %1334 = vdwg.mxu0
          %1335 = vst [vmem:[#allocation15] sm:$0xff] %v1330
        $region84: #{tpu_custom_call.1} parent=59 // pred_fallthru
          _
        // Predicated region
        $region85: #{tpu_custom_call.1} parent=59 // pred_check
          %p1336 = pneg %p274
        $region86: #{tpu_custom_call.1} parent=59 // pred_check_branch
          %1338 = sbr.rel (%p1336) target = $region88
        $region87: #{tpu_custom_call.1} parent=59 // pred_region
          %s1340 = ssub.s32 128, 128
          %1341 = vsyncadd [#allocation9], %s1340
          %s1342 = smul.addr %s31, 128
          %s1343 = scalar_lea.hbm %s10, %s1342
          %s1345 = sshll.u32 [#allocation15], 4
          %s1346 = int_to_ptr.vmem [resolvable:$true] %s1345
          %1348 = dma.vmem_to_hbm [thread:$0]  %s1346, 128, %s1343, [#allocation9]
        $region88: #{tpu_custom_call.1} parent=59 // pred_fallthru
          _
        // Predicated region
        $region89: #{tpu_custom_call.1} parent=59 // pred_check
          %p1349 = pneg %p274
        $region90: #{tpu_custom_call.1} parent=59 // pred_check_branch
          %1351 = sbr.rel (%p1349) target = $region92
        $region91: #{tpu_custom_call.1} parent=59 // pred_region
          %1352 = dma.done [#allocation9], 128
        $region92: #{tpu_custom_call.1} parent=59 // pred_fallthru
          _
      $region60: #{tpu_custom_call.1} parent=5 // pred_fallthru
        _
      %p1353 = scmp.le.s32.totalorder 2, %s22
      // Predicated region
      $region93: #{tpu_custom_call.1} parent=5 // pred_check
        %p1354 = pneg %p1353
      $region94: #{tpu_custom_call.1} parent=5 // pred_check_branch
        %1356 = sbr.rel (%p1354) target = $region96
      $region95: #{tpu_custom_call.1} parent=5 // pred_region
        %s1357 = ssub.s32 %s22, 2
      $region96: #{tpu_custom_call.1} parent=5 // pred_fallthru
        _
    $region6: #{tpu_custom_call.1} parent=1 // loop_footer
      %s26 = sadd.s32 1, %s22
    $region7: #{tpu_custom_call.1} parent=1 // loop_footer_branch
      %21 = sbr.rel target = $region3
    $region8: #{tpu_custom_call.1} parent=1 // loop_exit
      _
    %1358 = vsyncpa [#allocation8], 1
    %s1359 = scalar_lea.sflag [#allocation8], 1
    %1360 = vsyncpa %s1359, 1
    %1361 = vsyncpa [#allocation11], 1
    %1362 = vsyncpa [#allocation14], 1
    %1363 = vsyncpa [#allocation9], 1
    %s1364 = scalar_lea.sflag [#allocation9], 1
    %1365 = vsyncpa %s1364, 1

</llo_original>
